<compile_context>
chip_gen: v6e
topology: v6e:2x2x1
jax: 0.10.0
libtpu: 0.0.40
codegen_flags: <defaults>
</compile_context>

<pallas_src>
import jax
import jax.numpy as jnp
import numpy as np
from jax import lax
from jax.experimental import pallas as pl
from jax.experimental.pallas import tpu as pltpu

# ----- model / problem dimensions (small, consistent with the module) -----
B = 2                 # batch
S = 8                 # sequence length (tokens)
D = 32                # D_dim (model dim)
EXPAND = 2
DI = EXPAND * D       # dim_inner = 64
N = 8                 # d_state
DT_RANK = 4           # dt_rank
D_CONV = 4            # mamba conv kernel size
LN_EPS = 1e-5         # torch.nn.LayerNorm default eps

# ---- parameter-slab layout (row starts 8-aligned, lanes padded to 128) ----
R_WADA = 0        # (2D, 3D)          = (64, 96)
R_WIN = 64        # (D, 2*DI)         = (32, 128)
R_WXPROJ = 96     # (DI, DT_RANK+2N)  = (64, 20)
R_WOUT = 160      # (DI, D)           = (64, 32)
R_WDT = 224       # (DT_RANK, DI)     = (4, 64)
R_ALOG = 232      # (N, DI)           = (8, 64)
R_CONVW = 240     # (D_CONV, DI)      = (4, 64)
R_VEC = 248       # 6 row-vectors in one aligned (8,128) tile
SLAB_ROWS = 256
SLAB_LANES = 128
V_BADA, V_LNG, V_LNB, V_CONVB, V_BDT, V_DPARAM = range(6)


def _silu(v):
    return v * jax.nn.sigmoid(v)


def _softplus(v):
    return jnp.maximum(v, 0.0) + jnp.log1p(jnp.exp(-jnp.abs(v)))


# --------------------------- Pallas kernel --------------------------------
def _mamba_block_kernel(x_ref, c_ref, p_ref, out_ref):
    x = x_ref[...]                                   # (B, S, D)
    c = c_ref[...]                                   # (B, 2D)

    # --- parameter slices out of the single packed slab (all static) ---
    w_ada = p_ref[R_WADA:R_WADA + 2 * D, 0:3 * D]               # (64, 96)
    w_in = p_ref[R_WIN:R_WIN + D, 0:2 * DI]                     # (32, 128)
    w_xproj = p_ref[R_WXPROJ:R_WXPROJ + DI, 0:DT_RANK + 2 * N]  # (64, 20)
    w_out = p_ref[R_WOUT:R_WOUT + DI, 0:D]                      # (64, 32)
    w_dt = p_ref[R_WDT:R_WDT + DT_RANK, 0:DI]                   # (4, 64)
    a_log_t = p_ref[R_ALOG:R_ALOG + N, 0:DI]                    # (8, 64)
    conv_w = p_ref[R_CONVW:R_CONVW + D_CONV, 0:DI]              # (4, 64)
    vecs = p_ref[R_VEC:R_VEC + 8, :]          # one aligned (8,128) read
    b_ada = vecs[V_BADA:V_BADA + 1, 0:3 * D]                    # (1, 96)
    ln_g = vecs[V_LNG:V_LNG + 1, 0:D]                           # (1, 32)
    ln_b = vecs[V_LNB:V_LNB + 1, 0:D]                           # (1, 32)
    conv_b = vecs[V_CONVB:V_CONVB + 1, 0:DI]                    # (1, 64)
    b_dt = vecs[V_BDT:V_BDT + 1, 0:DI]                          # (1, 64)
    d_param = vecs[V_DPARAM:V_DPARAM + 1, 0:DI]                 # (1, 64)

    # --- adaLN modulation: SiLU -> Linear(2D -> 3D), chunk into 3 ---
    ada = jnp.dot(_silu(c), w_ada, preferred_element_type=jnp.float32) + b_ada
    shift = ada[:, 0:D]                      # (B, D)
    scale = ada[:, D:2 * D]                  # (B, D)
    gate = ada[:, 2 * D:3 * D]               # (B, D)

    # --- LayerNorm(D) + modulate (whole batch at once) ---
    mean = jnp.mean(x, axis=-1, keepdims=True)
    xc0 = x - mean
    var = jnp.mean(xc0 * xc0, axis=-1, keepdims=True)
    xn = xc0 * lax.rsqrt(var + LN_EPS)
    xn = xn * ln_g + ln_b                                     # (B, S, D)
    xm = xn * (1.0 + scale[:, None, :]) + shift[:, None, :]   # (B, S, D)

    # --- mamba: in_proj over all B*S tokens -> (x_part, z) ---
    xz = jnp.dot(xm.reshape(B * S, D), w_in,
                 preferred_element_type=jnp.float32)          # (B*S, 2*DI)
    xz3 = xz.reshape(B, S, 2 * DI)
    xp3 = xz3[..., 0:DI]                                      # (B, S, DI)
    z3 = xz3[..., DI:2 * DI]                                  # (B, S, DI)

    # --- causal depthwise conv1d (kernel=D_CONV) + SiLU, batched over B,
    #     built from shifted copies (no VMEM scratch) ---
    acc = xp3 * conv_w[D_CONV - 1:D_CONV, :] + conv_b         # lag 0 + bias
    for lag in range(1, D_CONV):
        wk = conv_w[D_CONV - 1 - lag:D_CONV - lag, :]         # (1, DI)
        shifted = jnp.concatenate(
            [jnp.zeros((B, lag, DI), jnp.float32), xp3[:, 0:S - lag, :]],
            axis=1)                                           # causal shift
        acc = acc + shifted * wk
    xcv3 = _silu(acc)                                         # (B, S, DI)
    xcv2 = xcv3.reshape(B * S, DI)

    # --- x_proj / dt_proj (batched over all tokens) ---
    x_dbl = jnp.dot(xcv2, w_xproj, preferred_element_type=jnp.float32)
    dt2 = _softplus(
        jnp.dot(x_dbl[:, 0:DT_RANK], w_dt, preferred_element_type=jnp.float32)
        + b_dt)                                               # (B*S, DI)
    dt3 = dt2.reshape(B, S, DI)
    Bm3 = x_dbl[:, DT_RANK:DT_RANK + N].reshape(B, S, N)
    Cm3 = x_dbl[:, DT_RANK + N:DT_RANK + 2 * N].reshape(B, S, N)

    A = -jnp.exp(a_log_t)                                     # (N, DI)

    # --- selective scan (batched over B): hoist exp/broadcast setup out of
    #     the loop, keep the recurrence a pure FMA chain, do the
    #     C-contraction once afterwards ---
    dA_all = jnp.exp(dt3[:, :, None, :] * A[None, None, :, :])     # (B,S,N,DI)
    dBx_all = Bm3[:, :, :, None] * (dt3 * xcv3)[:, :, None, :]     # (B,S,N,DI)

    h = jnp.zeros((B, N, DI), jnp.float32)
    hs = []
    for t in range(S):
        h = dA_all[:, t] * h + dBx_all[:, t]                  # pure VPU FMA
        hs.append(h)
    hstk = jnp.stack(hs, axis=1)                              # (B, S, N, DI)
    y3 = jnp.sum(Cm3[:, :, :, None] * hstk, axis=2) + d_param * xcv3

    # --- gating + out_proj + gated residual ---
    y3 = y3 * _silu(z3)
    out_inner = jnp.dot(y3.reshape(B * S, DI), w_out,
                        preferred_element_type=jnp.float32).reshape(B, S, D)
    out_ref[...] = (x + gate[:, None, :] * out_inner).astype(out_ref.dtype)


# --------------------------- wrapper ---------------------------------------
@jax.jit
def vmamba_mamba_block(x, c, w, param_slab):
    del w  # `w` is unused in the reference forward as well
    return pl.pallas_call(
        _mamba_block_kernel,
        out_shape=jax.ShapeDtypeStruct((B, S, D), x.dtype),
        grid=(1,),
        in_specs=[
            pl.BlockSpec((B, S, D), lambda i: (0, 0, 0)),             # x
            pl.BlockSpec((B, 2 * D), lambda i: (0, 0)),               # c
            pl.BlockSpec((SLAB_ROWS, SLAB_LANES), lambda i: (0, 0)),  # params
        ],
        out_specs=pl.BlockSpec((B, S, D), lambda i: (0, 0, 0)),
        compiler_params=pltpu.CompilerParams(
            dimension_semantics=("arbitrary",)),
    )(x, c, param_slab)


# --------------------------- parameters ------------------------------------
def make_params(key):
    ks = jax.random.split(key, 6)

    def xavier(k, shape):
        fan_in, fan_out = shape
        limit = (6.0 / (fan_in + fan_out)) ** 0.5
        return jax.random.uniform(k, shape, jnp.float32, -limit, limit)

    return dict(
        w_ada=xavier(ks[0], (2 * D, 3 * D)),
        b_ada=jnp.zeros((1, 3 * D), jnp.float32),
        ln_g=jnp.ones((1, D), jnp.float32),
        ln_b=jnp.zeros((1, D), jnp.float32),
        w_in=xavier(ks[1], (D, 2 * DI)),
        conv_w=jax.random.normal(ks[2], (D_CONV, DI), jnp.float32) * 0.2,
        conv_b=jnp.zeros((1, DI), jnp.float32),
        w_xproj=xavier(ks[3], (DI, DT_RANK + 2 * N)),
        w_dt=xavier(ks[4], (DT_RANK, DI)),
        b_dt=jnp.zeros((1, DI), jnp.float32),
        a_log_t=jnp.log(jnp.broadcast_to(
            jnp.arange(1, N + 1, dtype=jnp.float32)[:, None], (N, DI))),
        d_param=jnp.ones((1, DI), jnp.float32),
        w_out=xavier(ks[5], (DI, D)),
    )


def pack_params(p):
    """Pack all parameters into one lane-dense (256, 128) f32 slab."""
    slab = np.zeros((SLAB_ROWS, SLAB_LANES), np.float32)

    def put(row, a):
        a = np.asarray(a, np.float32)
        slab[row:row + a.shape[0], :a.shape[1]] = a

    put(R_WADA, p['w_ada'])
    put(R_WIN, p['w_in'])
    put(R_WXPROJ, p['w_xproj'])
    put(R_WOUT, p['w_out'])
    put(R_WDT, p['w_dt'])
    put(R_ALOG, p['a_log_t'])
    put(R_CONVW, p['conv_w'])
    put(R_VEC + V_BADA, p['b_ada'])
    put(R_VEC + V_LNG, p['ln_g'])
    put(R_VEC + V_LNB, p['ln_b'])
    put(R_VEC + V_CONVB, p['conv_b'])
    put(R_VEC + V_BDT, p['b_dt'])
    put(R_VEC + V_DPARAM, p['d_param'])
    return jnp.asarray(slab)


# --------------------------- pure-JAX reference -----------------------------
def reference(x, c, p):
    ada = _silu(c) @ p['w_ada'] + p['b_ada']
    shift, scale, gate = ada[:, :D], ada[:, D:2 * D], ada[:, 2 * D:]
    mean = jnp.mean(x, -1, keepdims=True)
    xc0 = x - mean
    var = jnp.mean(xc0 * xc0, -1, keepdims=True)
    xn = xc0 * lax.rsqrt(var + LN_EPS)
    xn = xn * p['ln_g'] + p['ln_b']
    xm = xn * (1.0 + scale[:, None, :]) + shift[:, None, :]

    xz = jnp.einsum('bsd,de->bse', xm, p['w_in'])
    xp, z = xz[..., :DI], xz[..., DI:]
    xp_pad = jnp.pad(xp, ((0, 0), (D_CONV - 1, 0), (0, 0)))
    acc = jnp.zeros_like(xp) + p['conv_b']
    for k in range(D_CONV):
        acc = acc + xp_pad[:, k:k + S, :] * p['conv_w'][k]
    xcv = _silu(acc)

    x_dbl = jnp.einsum('bsd,de->bse', xcv, p['w_xproj'])
    dt = _softplus(jnp.einsum('bsr,re->bse', x_dbl[..., :DT_RANK], p['w_dt'])
                   + p['b_dt'])
    Bm = x_dbl[..., DT_RANK:DT_RANK + N]
    Cm = x_dbl[..., DT_RANK + N:]
    A = -jnp.exp(p['a_log_t'])               # (N, DI)

    def scan_b(xc_b, dt_b, B_b, C_b):
        def step(h, inp):
            dt_t, x_t, b_t, c_t = inp
            dA = jnp.exp(dt_t[None, :] * A)
            dBx = b_t[:, None] * (dt_t * x_t)[None, :]
            h = dA * h + dBx
            y = c_t @ h + p['d_param'][0] * x_t
            return h, y
        _, ys = lax.scan(step, jnp.zeros((N, DI), jnp.float32),
                         (dt_b, xc_b, B_b, C_b))
        return ys

    y = jax.vmap(scan_b)(xcv, dt, Bm, Cm)
    y = y * _silu(z)
    out_inner = jnp.einsum('bse,ed->bsd', y, p['w_out'])
    return x + gate[:, None, :] * out_inner


# --------------------------- main -------------------------------------------
if __name__ == "__main__":
    key = jax.random.PRNGKey(0)
    kx, kc, kw, kp = jax.random.split(key, 4)
    x = jax.random.normal(kx, (B, S, D), jnp.float32)
    c = jax.random.normal(kc, (B, 2 * D), jnp.float32)   # conditioning, dim 2*D
    w = jax.random.normal(kw, (B, D), jnp.float32)       # unused by the forward
    params = make_params(kp)
    param_slab = pack_params(params)

    out = vmamba_mamba_block(x, c, w, param_slab)
    out = jax.block_until_ready(out)

    ref = reference(x, c, params)
    assert out.shape == (B, S, D)
    np.testing.assert_allclose(np.asarray(out), np.asarray(ref),
                               rtol=2e-2, atol=2e-2)
    print("KERNEL_OK")
</pallas_src>

<mosaic_0001>
module attributes {stable_mosaic.version = 11 : i64} {
  func.func @_mamba_block_kernel(%arg0: i32, %arg1: memref<2x8x32xf32, #tpu.memory_space<vmem>>, %arg2: memref<2x64xf32, #tpu.memory_space<vmem>>, %arg3: memref<256x128xf32, #tpu.memory_space<vmem>>, %arg4: memref<2x8x32xf32, #tpu.memory_space<vmem>>) attributes {dimension_semantics = [#tpu.dimension_semantics<arbitrary>], iteration_bounds = array<i64: 1>, scalar_prefetch = 0 : i64, scratch_operands = 0 : i64, tpu.core_type = #tpu.core_type<tc>, window_params = [{pipeline_mode = #tpu.pipeline_mode<synchronous>, transform_indices = @transform_0, window_bounds = array<i64: 2, 8, 32>}, {pipeline_mode = #tpu.pipeline_mode<synchronous>, transform_indices = @transform_1, window_bounds = array<i64: 2, 64>}, {pipeline_mode = #tpu.pipeline_mode<synchronous>, transform_indices = @transform_2, window_bounds = array<i64: 256, 128>}, {pipeline_mode = #tpu.pipeline_mode<synchronous>, transform_indices = @transform_3, window_bounds = array<i64: 2, 8, 32>}]} {
    %c0 = arith.constant 0 : index
    %c0_0 = arith.constant 0 : index
    %c0_1 = arith.constant 0 : index
    %0 = vector.load %arg1[%c0, %c0_0, %c0_1] : memref<2x8x32xf32, #tpu.memory_space<vmem>>, vector<2x8x32xf32>
    %c0_2 = arith.constant 0 : index
    %c0_3 = arith.constant 0 : index
    %1 = vector.load %arg2[%c0_2, %c0_3] : memref<2x64xf32, #tpu.memory_space<vmem>>, vector<2x64xf32>
    %c0_4 = arith.constant 0 : index
    %c0_5 = arith.constant 0 : index
    %2 = vector.load %arg3[%c0_4, %c0_5] : memref<256x128xf32, #tpu.memory_space<vmem>>, vector<64x96xf32>
    %c64 = arith.constant 64 : index
    %c0_6 = arith.constant 0 : index
    %3 = vector.load %arg3[%c64, %c0_6] : memref<256x128xf32, #tpu.memory_space<vmem>>, vector<32x128xf32>
    %c96 = arith.constant 96 : index
    %c0_7 = arith.constant 0 : index
    %4 = vector.load %arg3[%c96, %c0_7] : memref<256x128xf32, #tpu.memory_space<vmem>>, vector<64x20xf32>
    %c160 = arith.constant 160 : index
    %c0_8 = arith.constant 0 : index
    %5 = vector.load %arg3[%c160, %c0_8] : memref<256x128xf32, #tpu.memory_space<vmem>>, vector<64x32xf32>
    %c224 = arith.constant 224 : index
    %c0_9 = arith.constant 0 : index
    %6 = vector.load %arg3[%c224, %c0_9] : memref<256x128xf32, #tpu.memory_space<vmem>>, vector<4x64xf32>
    %c232 = arith.constant 232 : index
    %c0_10 = arith.constant 0 : index
    %7 = vector.load %arg3[%c232, %c0_10] : memref<256x128xf32, #tpu.memory_space<vmem>>, vector<8x64xf32>
    %c240 = arith.constant 240 : index
    %c0_11 = arith.constant 0 : index
    %8 = vector.load %arg3[%c240, %c0_11] : memref<256x128xf32, #tpu.memory_space<vmem>>, vector<4x64xf32>
    %c248 = arith.constant 248 : index
    %c0_12 = arith.constant 0 : index
    %9 = vector.load %arg3[%c248, %c0_12] : memref<256x128xf32, #tpu.memory_space<vmem>>, vector<8x128xf32>
    %10 = vector.extract_strided_slice %9 {offsets = [0, 0], sizes = [1, 96], strides = [1, 1]} : vector<8x128xf32> to vector<1x96xf32>
    %11 = vector.extract_strided_slice %9 {offsets = [1, 0], sizes = [1, 32], strides = [1, 1]} : vector<8x128xf32> to vector<1x32xf32>
    %12 = vector.extract_strided_slice %9 {offsets = [2, 0], sizes = [1, 32], strides = [1, 1]} : vector<8x128xf32> to vector<1x32xf32>
    %13 = vector.extract_strided_slice %9 {offsets = [3, 0], sizes = [1, 64], strides = [1, 1]} : vector<8x128xf32> to vector<1x64xf32>
    %14 = vector.extract_strided_slice %9 {offsets = [4, 0], sizes = [1, 64], strides = [1, 1]} : vector<8x128xf32> to vector<1x64xf32>
    %15 = vector.extract_strided_slice %9 {offsets = [5, 0], sizes = [1, 64], strides = [1, 1]} : vector<8x128xf32> to vector<1x64xf32>
    %16 = arith.negf %1 : vector<2x64xf32>
    %17 = math.exp %16 : vector<2x64xf32>
    %cst = arith.constant 1.000000e+00 : f32
    %18 = vector.broadcast %cst : f32 to vector<2x64xf32>
    %19 = arith.addf %18, %17 : vector<2x64xf32>
    %20 = arith.divf %18, %19 : vector<2x64xf32>
    %21 = arith.mulf %1, %20 : vector<2x64xf32>
    %cst_13 = arith.constant dense<0.000000e+00> : vector<2x96xf32>
    %22 = tpu.matmul %21, %2, %cst_13 {dimension_numbers = #tpu.dot_dimension_numbers<[1], [0], [0], [1], [0, 0, 1, 1], [], []>} : vector<2x64xf32>, vector<64x96xf32>, vector<2x96xf32> -> vector<2x96xf32>
    %23 = vector.broadcast %10 : vector<1x96xf32> to vector<2x96xf32>
    %24 = arith.addf %22, %23 : vector<2x96xf32>
    %25 = vector.extract_strided_slice %24 {offsets = [0, 0], sizes = [2, 32], strides = [1, 1]} : vector<2x96xf32> to vector<2x32xf32>
    %26 = vector.extract_strided_slice %24 {offsets = [0, 32], sizes = [2, 32], strides = [1, 1]} : vector<2x96xf32> to vector<2x32xf32>
    %27 = vector.extract_strided_slice %24 {offsets = [0, 64], sizes = [2, 32], strides = [1, 1]} : vector<2x96xf32> to vector<2x32xf32>
    %cst_14 = arith.constant dense<0.000000e+00> : vector<2x8xf32>
    %28 = vector.multi_reduction <add>, %0, %cst_14 [2] : vector<2x8x32xf32> to vector<2x8xf32>
    %29 = vector.shape_cast %28 : vector<2x8xf32> to vector<2x8x1xf32>
    %cst_15 = arith.constant 3.200000e+01 : f32
    %30 = vector.broadcast %cst_15 : f32 to vector<2x8x1xf32>
    %31 = arith.divf %29, %30 : vector<2x8x1xf32>
    %32 = vector.broadcast %31 : vector<2x8x1xf32> to vector<2x8x32xf32>
    %33 = arith.subf %0, %32 : vector<2x8x32xf32>
    %34 = arith.mulf %33, %33 : vector<2x8x32xf32>
    %cst_16 = arith.constant dense<0.000000e+00> : vector<2x8xf32>
    %35 = vector.multi_reduction <add>, %34, %cst_16 [2] : vector<2x8x32xf32> to vector<2x8xf32>
    %36 = vector.shape_cast %35 : vector<2x8xf32> to vector<2x8x1xf32>
    %cst_17 = arith.constant 3.200000e+01 : f32
    %37 = vector.broadcast %cst_17 : f32 to vector<2x8x1xf32>
    %38 = arith.divf %36, %37 : vector<2x8x1xf32>
    %cst_18 = arith.constant 9.99999974E-6 : f32
    %39 = vector.broadcast %cst_18 : f32 to vector<2x8x1xf32>
    %40 = arith.addf %38, %39 : vector<2x8x1xf32>
    %41 = math.rsqrt %40 : vector<2x8x1xf32>
    %42 = vector.broadcast %41 : vector<2x8x1xf32> to vector<2x8x32xf32>
    %43 = arith.mulf %33, %42 : vector<2x8x32xf32>
    %44 = vector.shape_cast %11 : vector<1x32xf32> to vector<1x1x32xf32>
    %45 = vector.broadcast %44 : vector<1x1x32xf32> to vector<2x8x32xf32>
    %46 = arith.mulf %43, %45 : vector<2x8x32xf32>
    %47 = vector.shape_cast %12 : vector<1x32xf32> to vector<1x1x32xf32>
    %48 = vector.broadcast %47 : vector<1x1x32xf32> to vector<2x8x32xf32>
    %49 = arith.addf %46, %48 : vector<2x8x32xf32>
    %50 = vector.shape_cast %26 : vector<2x32xf32> to vector<2x1x32xf32>
    %cst_19 = arith.constant 1.000000e+00 : f32
    %51 = vector.broadcast %cst_19 : f32 to vector<2x1x32xf32>
    %52 = arith.addf %51, %50 : vector<2x1x32xf32>
    %53 = vector.broadcast %52 : vector<2x1x32xf32> to vector<2x8x32xf32>
    %54 = arith.mulf %49, %53 : vector<2x8x32xf32>
    %55 = vector.shape_cast %25 : vector<2x32xf32> to vector<2x1x32xf32>
    %56 = vector.broadcast %55 : vector<2x1x32xf32> to vector<2x8x32xf32>
    %57 = arith.addf %54, %56 : vector<2x8x32xf32>
    %58 = vector.shape_cast %57 : vector<2x8x32xf32> to vector<16x32xf32>
    %cst_20 = arith.constant dense<0.000000e+00> : vector<16x128xf32>
    %59 = tpu.matmul %58, %3, %cst_20 {dimension_numbers = #tpu.dot_dimension_numbers<[1], [0], [0], [1], [0, 0, 1, 1], [], []>} : vector<16x32xf32>, vector<32x128xf32>, vector<16x128xf32> -> vector<16x128xf32>
    %60 = vector.shape_cast %59 : vector<16x128xf32> to vector<2x8x128xf32>
    %61 = vector.extract_strided_slice %60 {offsets = [0, 0, 0], sizes = [2, 8, 64], strides = [1, 1, 1]} : vector<2x8x128xf32> to vector<2x8x64xf32>
    %62 = vector.extract_strided_slice %60 {offsets = [0, 0, 64], sizes = [2, 8, 64], strides = [1, 1, 1]} : vector<2x8x128xf32> to vector<2x8x64xf32>
    %63 = vector.extract_strided_slice %8 {offsets = [3, 0], sizes = [1, 64], strides = [1, 1]} : vector<4x64xf32> to vector<1x64xf32>
    %64 = vector.shape_cast %63 : vector<1x64xf32> to vector<1x1x64xf32>
    %65 = vector.broadcast %64 : vector<1x1x64xf32> to vector<2x8x64xf32>
    %66 = arith.mulf %61, %65 : vector<2x8x64xf32>
    %67 = vector.shape_cast %13 : vector<1x64xf32> to vector<1x1x64xf32>
    %68 = vector.broadcast %67 : vector<1x1x64xf32> to vector<2x8x64xf32>
    %69 = arith.addf %66, %68 : vector<2x8x64xf32>
    %70 = vector.extract_strided_slice %8 {offsets = [2, 0], sizes = [1, 64], strides = [1, 1]} : vector<4x64xf32> to vector<1x64xf32>
    %cst_21 = arith.constant 0.000000e+00 : f32
    %71 = vector.broadcast %cst_21 : f32 to vector<2x1x64xf32>
    %72 = vector.extract_strided_slice %61 {offsets = [0, 0, 0], sizes = [2, 7, 64], strides = [1, 1, 1]} : vector<2x8x64xf32> to vector<2x7x64xf32>
    %73 = tpu.concatenate %71, %72 in 1 : vector<2x1x64xf32>, vector<2x7x64xf32> -> vector<2x8x64xf32>
    %74 = vector.shape_cast %70 : vector<1x64xf32> to vector<1x1x64xf32>
    %75 = vector.broadcast %74 : vector<1x1x64xf32> to vector<2x8x64xf32>
    %76 = arith.mulf %73, %75 : vector<2x8x64xf32>
    %77 = arith.addf %69, %76 : vector<2x8x64xf32>
    %78 = vector.extract_strided_slice %8 {offsets = [1, 0], sizes = [1, 64], strides = [1, 1]} : vector<4x64xf32> to vector<1x64xf32>
    %cst_22 = arith.constant 0.000000e+00 : f32
    %79 = vector.broadcast %cst_22 : f32 to vector<2x2x64xf32>
    %80 = vector.extract_strided_slice %61 {offsets = [0, 0, 0], sizes = [2, 6, 64], strides = [1, 1, 1]} : vector<2x8x64xf32> to vector<2x6x64xf32>
    %81 = tpu.concatenate %79, %80 in 1 : vector<2x2x64xf32>, vector<2x6x64xf32> -> vector<2x8x64xf32>
    %82 = vector.shape_cast %78 : vector<1x64xf32> to vector<1x1x64xf32>
    %83 = vector.broadcast %82 : vector<1x1x64xf32> to vector<2x8x64xf32>
    %84 = arith.mulf %81, %83 : vector<2x8x64xf32>
    %85 = arith.addf %77, %84 : vector<2x8x64xf32>
    %86 = vector.extract_strided_slice %8 {offsets = [0, 0], sizes = [1, 64], strides = [1, 1]} : vector<4x64xf32> to vector<1x64xf32>
    %cst_23 = arith.constant 0.000000e+00 : f32
    %87 = vector.broadcast %cst_23 : f32 to vector<2x3x64xf32>
    %88 = vector.extract_strided_slice %61 {offsets = [0, 0, 0], sizes = [2, 5, 64], strides = [1, 1, 1]} : vector<2x8x64xf32> to vector<2x5x64xf32>
    %89 = tpu.concatenate %87, %88 in 1 : vector<2x3x64xf32>, vector<2x5x64xf32> -> vector<2x8x64xf32>
    %90 = vector.shape_cast %86 : vector<1x64xf32> to vector<1x1x64xf32>
    %91 = vector.broadcast %90 : vector<1x1x64xf32> to vector<2x8x64xf32>
    %92 = arith.mulf %89, %91 : vector<2x8x64xf32>
    %93 = arith.addf %85, %92 : vector<2x8x64xf32>
    %94 = arith.negf %93 : vector<2x8x64xf32>
    %95 = math.exp %94 : vector<2x8x64xf32>
    %cst_24 = arith.constant 1.000000e+00 : f32
    %96 = vector.broadcast %cst_24 : f32 to vector<2x8x64xf32>
    %97 = arith.addf %96, %95 : vector<2x8x64xf32>
    %98 = arith.divf %96, %97 : vector<2x8x64xf32>
    %99 = arith.mulf %93, %98 : vector<2x8x64xf32>
    %100 = vector.shape_cast %99 : vector<2x8x64xf32> to vector<16x64xf32>
    %cst_25 = arith.constant dense<0.000000e+00> : vector<16x20xf32>
    %101 = tpu.matmul %100, %4, %cst_25 {dimension_numbers = #tpu.dot_dimension_numbers<[1], [0], [0], [1], [0, 0, 1, 1], [], []>} : vector<16x64xf32>, vector<64x20xf32>, vector<16x20xf32> -> vector<16x20xf32>
    %102 = vector.extract_strided_slice %101 {offsets = [0, 0], sizes = [16, 4], strides = [1, 1]} : vector<16x20xf32> to vector<16x4xf32>
    %cst_26 = arith.constant dense<0.000000e+00> : vector<16x64xf32>
    %103 = tpu.matmul %102, %6, %cst_26 {dimension_numbers = #tpu.dot_dimension_numbers<[1], [0], [0], [1], [0, 0, 1, 1], [], []>} : vector<16x4xf32>, vector<4x64xf32>, vector<16x64xf32> -> vector<16x64xf32>
    %104 = vector.broadcast %14 : vector<1x64xf32> to vector<16x64xf32>
    %105 = arith.addf %103, %104 : vector<16x64xf32>
    %cst_27 = arith.constant 0.000000e+00 : f32
    %106 = vector.broadcast %cst_27 : f32 to vector<16x64xf32>
    %107 = arith.maximumf %105, %106 : vector<16x64xf32>
    %108 = math.absf %105 : vector<16x64xf32>
    %cst_28 = arith.constant 0.000000e+00 : f32
    %109 = vector.broadcast %cst_28 : f32 to vector<16x64xf32>
    %110 = arith.subf %109, %108 : vector<16x64xf32>
    %111 = math.exp %110 : vector<16x64xf32>
    %112 = math.log1p %111 : vector<16x64xf32>
    %113 = arith.addf %107, %112 : vector<16x64xf32>
    %114 = vector.shape_cast %113 : vector<16x64xf32> to vector<2x8x64xf32>
    %115 = vector.extract_strided_slice %101 {offsets = [0, 4], sizes = [16, 8], strides = [1, 1]} : vector<16x20xf32> to vector<16x8xf32>
    %116 = vector.shape_cast %115 : vector<16x8xf32> to vector<2x8x8xf32>
    %117 = vector.extract_strided_slice %101 {offsets = [0, 12], sizes = [16, 8], strides = [1, 1]} : vector<16x20xf32> to vector<16x8xf32>
    %118 = vector.shape_cast %117 : vector<16x8xf32> to vector<2x8x8xf32>
    %119 = math.exp %7 : vector<8x64xf32>
    %cst_29 = arith.constant 0.000000e+00 : f32
    %120 = vector.broadcast %cst_29 : f32 to vector<8x64xf32>
    %121 = arith.subf %120, %119 : vector<8x64xf32>
    %122 = vector.shape_cast %114 : vector<2x8x64xf32> to vector<2x8x1x64xf32>
    %123 = vector.shape_cast %121 : vector<8x64xf32> to vector<1x1x8x64xf32>
    %124 = vector.broadcast %122 : vector<2x8x1x64xf32> to vector<2x8x8x64xf32>
    %125 = vector.broadcast %123 : vector<1x1x8x64xf32> to vector<2x8x8x64xf32>
    %126 = arith.mulf %124, %125 : vector<2x8x8x64xf32>
    %127 = math.exp %126 : vector<2x8x8x64xf32>
    %128 = vector.shape_cast %116 : vector<2x8x8xf32> to vector<2x8x8x1xf32>
    %129 = arith.mulf %114, %99 : vector<2x8x64xf32>
    %130 = vector.shape_cast %129 : vector<2x8x64xf32> to vector<2x8x1x64xf32>
    %131 = vector.broadcast %128 : vector<2x8x8x1xf32> to vector<2x8x8x64xf32>
    %132 = vector.broadcast %130 : vector<2x8x1x64xf32> to vector<2x8x8x64xf32>
    %133 = arith.mulf %131, %132 : vector<2x8x8x64xf32>
    %cst_30 = arith.constant 0.000000e+00 : f32
    %134 = vector.broadcast %cst_30 : f32 to vector<2x8x64xf32>
    %135 = vector.extract_strided_slice %127 {offsets = [0, 0, 0, 0], sizes = [2, 1, 8, 64], strides = [1, 1, 1, 1]} : vector<2x8x8x64xf32> to vector<2x1x8x64xf32>
    %136 = vector.shape_cast %135 : vector<2x1x8x64xf32> to vector<2x8x64xf32>
    %137 = arith.mulf %136, %134 : vector<2x8x64xf32>
    %138 = vector.extract_strided_slice %133 {offsets = [0, 0, 0, 0], sizes = [2, 1, 8, 64], strides = [1, 1, 1, 1]} : vector<2x8x8x64xf32> to vector<2x1x8x64xf32>
    %139 = vector.shape_cast %138 : vector<2x1x8x64xf32> to vector<2x8x64xf32>
    %140 = arith.addf %137, %139 : vector<2x8x64xf32>
    %141 = vector.extract_strided_slice %127 {offsets = [0, 1, 0, 0], sizes = [2, 1, 8, 64], strides = [1, 1, 1, 1]} : vector<2x8x8x64xf32> to vector<2x1x8x64xf32>
    %142 = vector.shape_cast %141 : vector<2x1x8x64xf32> to vector<2x8x64xf32>
    %143 = arith.mulf %142, %140 : vector<2x8x64xf32>
    %144 = vector.extract_strided_slice %133 {offsets = [0, 1, 0, 0], sizes = [2, 1, 8, 64], strides = [1, 1, 1, 1]} : vector<2x8x8x64xf32> to vector<2x1x8x64xf32>
    %145 = vector.shape_cast %144 : vector<2x1x8x64xf32> to vector<2x8x64xf32>
    %146 = arith.addf %143, %145 : vector<2x8x64xf32>
    %147 = vector.extract_strided_slice %127 {offsets = [0, 2, 0, 0], sizes = [2, 1, 8, 64], strides = [1, 1, 1, 1]} : vector<2x8x8x64xf32> to vector<2x1x8x64xf32>
    %148 = vector.shape_cast %147 : vector<2x1x8x64xf32> to vector<2x8x64xf32>
    %149 = arith.mulf %148, %146 : vector<2x8x64xf32>
    %150 = vector.extract_strided_slice %133 {offsets = [0, 2, 0, 0], sizes = [2, 1, 8, 64], strides = [1, 1, 1, 1]} : vector<2x8x8x64xf32> to vector<2x1x8x64xf32>
    %151 = vector.shape_cast %150 : vector<2x1x8x64xf32> to vector<2x8x64xf32>
    %152 = arith.addf %149, %151 : vector<2x8x64xf32>
    %153 = vector.extract_strided_slice %127 {offsets = [0, 3, 0, 0], sizes = [2, 1, 8, 64], strides = [1, 1, 1, 1]} : vector<2x8x8x64xf32> to vector<2x1x8x64xf32>
    %154 = vector.shape_cast %153 : vector<2x1x8x64xf32> to vector<2x8x64xf32>
    %155 = arith.mulf %154, %152 : vector<2x8x64xf32>
    %156 = vector.extract_strided_slice %133 {offsets = [0, 3, 0, 0], sizes = [2, 1, 8, 64], strides = [1, 1, 1, 1]} : vector<2x8x8x64xf32> to vector<2x1x8x64xf32>
    %157 = vector.shape_cast %156 : vector<2x1x8x64xf32> to vector<2x8x64xf32>
    %158 = arith.addf %155, %157 : vector<2x8x64xf32>
    %159 = vector.extract_strided_slice %127 {offsets = [0, 4, 0, 0], sizes = [2, 1, 8, 64], strides = [1, 1, 1, 1]} : vector<2x8x8x64xf32> to vector<2x1x8x64xf32>
    %160 = vector.shape_cast %159 : vector<2x1x8x64xf32> to vector<2x8x64xf32>
    %161 = arith.mulf %160, %158 : vector<2x8x64xf32>
    %162 = vector.extract_strided_slice %133 {offsets = [0, 4, 0, 0], sizes = [2, 1, 8, 64], strides = [1, 1, 1, 1]} : vector<2x8x8x64xf32> to vector<2x1x8x64xf32>
    %163 = vector.shape_cast %162 : vector<2x1x8x64xf32> to vector<2x8x64xf32>
    %164 = arith.addf %161, %163 : vector<2x8x64xf32>
    %165 = vector.extract_strided_slice %127 {offsets = [0, 5, 0, 0], sizes = [2, 1, 8, 64], strides = [1, 1, 1, 1]} : vector<2x8x8x64xf32> to vector<2x1x8x64xf32>
    %166 = vector.shape_cast %165 : vector<2x1x8x64xf32> to vector<2x8x64xf32>
    %167 = arith.mulf %166, %164 : vector<2x8x64xf32>
    %168 = vector.extract_strided_slice %133 {offsets = [0, 5, 0, 0], sizes = [2, 1, 8, 64], strides = [1, 1, 1, 1]} : vector<2x8x8x64xf32> to vector<2x1x8x64xf32>
    %169 = vector.shape_cast %168 : vector<2x1x8x64xf32> to vector<2x8x64xf32>
    %170 = arith.addf %167, %169 : vector<2x8x64xf32>
    %171 = vector.extract_strided_slice %127 {offsets = [0, 6, 0, 0], sizes = [2, 1, 8, 64], strides = [1, 1, 1, 1]} : vector<2x8x8x64xf32> to vector<2x1x8x64xf32>
    %172 = vector.shape_cast %171 : vector<2x1x8x64xf32> to vector<2x8x64xf32>
    %173 = arith.mulf %172, %170 : vector<2x8x64xf32>
    %174 = vector.extract_strided_slice %133 {offsets = [0, 6, 0, 0], sizes = [2, 1, 8, 64], strides = [1, 1, 1, 1]} : vector<2x8x8x64xf32> to vector<2x1x8x64xf32>
    %175 = vector.shape_cast %174 : vector<2x1x8x64xf32> to vector<2x8x64xf32>
    %176 = arith.addf %173, %175 : vector<2x8x64xf32>
    %177 = vector.extract_strided_slice %127 {offsets = [0, 7, 0, 0], sizes = [2, 1, 8, 64], strides = [1, 1, 1, 1]} : vector<2x8x8x64xf32> to vector<2x1x8x64xf32>
    %178 = vector.shape_cast %177 : vector<2x1x8x64xf32> to vector<2x8x64xf32>
    %179 = arith.mulf %178, %176 : vector<2x8x64xf32>
    %180 = vector.extract_strided_slice %133 {offsets = [0, 7, 0, 0], sizes = [2, 1, 8, 64], strides = [1, 1, 1, 1]} : vector<2x8x8x64xf32> to vector<2x1x8x64xf32>
    %181 = vector.shape_cast %180 : vector<2x1x8x64xf32> to vector<2x8x64xf32>
    %182 = arith.addf %179, %181 : vector<2x8x64xf32>
    %183 = vector.shape_cast %140 : vector<2x8x64xf32> to vector<2x1x8x64xf32>
    %184 = vector.shape_cast %146 : vector<2x8x64xf32> to vector<2x1x8x64xf32>
    %185 = vector.shape_cast %152 : vector<2x8x64xf32> to vector<2x1x8x64xf32>
    %186 = vector.shape_cast %158 : vector<2x8x64xf32> to vector<2x1x8x64xf32>
    %187 = vector.shape_cast %164 : vector<2x8x64xf32> to vector<2x1x8x64xf32>
    %188 = vector.shape_cast %170 : vector<2x8x64xf32> to vector<2x1x8x64xf32>
    %189 = vector.shape_cast %176 : vector<2x8x64xf32> to vector<2x1x8x64xf32>
    %190 = vector.shape_cast %182 : vector<2x8x64xf32> to vector<2x1x8x64xf32>
    %191 = tpu.concatenate %183, %184, %185, %186, %187, %188, %189, %190 in 1 : vector<2x1x8x64xf32>, vector<2x1x8x64xf32>, vector<2x1x8x64xf32>, vector<2x1x8x64xf32>, vector<2x1x8x64xf32>, vector<2x1x8x64xf32>, vector<2x1x8x64xf32>, vector<2x1x8x64xf32> -> vector<2x8x8x64xf32>
    %192 = vector.shape_cast %118 : vector<2x8x8xf32> to vector<2x8x8x1xf32>
    %193 = vector.broadcast %192 : vector<2x8x8x1xf32> to vector<2x8x8x64xf32>
    %194 = arith.mulf %193, %191 : vector<2x8x8x64xf32>
    %cst_31 = arith.constant dense<0.000000e+00> : vector<2x8x64xf32>
    %195 = vector.multi_reduction <add>, %194, %cst_31 [2] : vector<2x8x8x64xf32> to vector<2x8x64xf32>
    %196 = vector.shape_cast %15 : vector<1x64xf32> to vector<1x1x64xf32>
    %197 = vector.broadcast %196 : vector<1x1x64xf32> to vector<2x8x64xf32>
    %198 = arith.mulf %197, %99 : vector<2x8x64xf32>
    %199 = arith.addf %195, %198 : vector<2x8x64xf32>
    %200 = arith.negf %62 : vector<2x8x64xf32>
    %201 = math.exp %200 : vector<2x8x64xf32>
    %cst_32 = arith.constant 1.000000e+00 : f32
    %202 = vector.broadcast %cst_32 : f32 to vector<2x8x64xf32>
    %203 = arith.addf %202, %201 : vector<2x8x64xf32>
    %204 = arith.divf %202, %203 : vector<2x8x64xf32>
    %205 = arith.mulf %62, %204 : vector<2x8x64xf32>
    %206 = arith.mulf %199, %205 : vector<2x8x64xf32>
    %207 = vector.shape_cast %206 : vector<2x8x64xf32> to vector<16x64xf32>
    %cst_33 = arith.constant dense<0.000000e+00> : vector<16x32xf32>
    %208 = tpu.matmul %207, %5, %cst_33 {dimension_numbers = #tpu.dot_dimension_numbers<[1], [0], [0], [1], [0, 0, 1, 1], [], []>} : vector<16x64xf32>, vector<64x32xf32>, vector<16x32xf32> -> vector<16x32xf32>
    %209 = vector.shape_cast %208 : vector<16x32xf32> to vector<2x8x32xf32>
    %210 = vector.shape_cast %27 : vector<2x32xf32> to vector<2x1x32xf32>
    %211 = vector.broadcast %210 : vector<2x1x32xf32> to vector<2x8x32xf32>
    %212 = arith.mulf %211, %209 : vector<2x8x32xf32>
    %213 = arith.addf %0, %212 : vector<2x8x32xf32>
    %c0_34 = arith.constant 0 : index
    %c0_35 = arith.constant 0 : index
    %c0_36 = arith.constant 0 : index
    %214 = vector.load %arg4[%c0_34, %c0_35, %c0_36] : memref<2x8x32xf32, #tpu.memory_space<vmem>>, vector<2x8x32xf32>
    tpu.vector_store %arg4[%c0_34, %c0_35, %c0_36], %213 {strides = array<i32>} : memref<2x8x32xf32, #tpu.memory_space<vmem>>, vector<2x8x32xf32>,
    return
  }
  func.func @transform_0(%arg0: i32) -> (i32, i32, i32) {
    %c0_i32 = arith.constant 0 : i32
    %c0_i32_0 = arith.constant 0 : i32
    %c0_i32_1 = arith.constant 0 : i32
    %c0_i32_2 = arith.constant 0 : i32
    return %c0_i32, %c0_i32_0, %c0_i32_1 : i32, i32, i32
  }
  func.func @transform_1(%arg0: i32) -> (i32, i32) {
    %c0_i32 = arith.constant 0 : i32
    %c0_i32_0 = arith.constant 0 : i32
    %c0_i32_1 = arith.constant 0 : i32
    return %c0_i32, %c0_i32_0 : i32, i32
  }
  func.func @transform_2(%arg0: i32) -> (i32, i32) {
    %c0_i32 = arith.constant 0 : i32
    %c0_i32_0 = arith.constant 0 : i32
    %c0_i32_1 = arith.constant 0 : i32
    return %c0_i32, %c0_i32_0 : i32, i32
  }
  func.func @transform_3(%arg0: i32) -> (i32, i32, i32) {
    %c0_i32 = arith.constant 0 : i32
    %c0_i32_0 = arith.constant 0 : i32
    %c0_i32_1 = arith.constant 0 : i32
    %c0_i32_2 = arith.constant 0 : i32
    return %c0_i32, %c0_i32_0, %c0_i32_1 : i32, i32, i32
  }
}

</mosaic_0001>

<llo_original>
// kernel: vmamba_mamba_block.1
$region0: #{vmamba_mamba_block.1}
  #allocation0 [shape = 'u32[]', space=smem, size = 0x4, offset = 0x4, fixed_abs, tag = 'smem constant byte address 0x4 - core index']
  #allocation1 [shape = 'u32[144,128]{1,0:T(1,128)}', space=vmem, size = 0x12000, scoped, tag = 'internal scratch']
  %s0 = inlined_call_operand.hbm [shape: f32[2,8,32], index: 0, kind: input, shape index: {}]
  %s1 = inlined_call_operand.hbm [shape: f32[2,64], index: 1, kind: input, shape index: {}]
  %s2 = inlined_call_operand.hbm [shape: f32[256,128], index: 2, kind: input, shape index: {}]
  %s3 = inlined_call_operand.hbm [shape: f32[2,8,32], index: 3, kind: output, shape index: {}]
  %s4 = sld [smem:[#allocation0]]
  $region34: #{vmamba_mamba_block.1} parent=0
    _
  %s6 = ssub.s32 1, %s4
  %s7 = scalar_select 0, %s6, %s4
  $region1: #{vmamba_mamba_block.1} parent=0
    #allocation2 [shape = 'u8[8192]{0}', space=vmem, size = 0x2000, scoped, tag = 'input window, operand 0, single buffered']
    #allocation3 [shape = 's32[1]{0}', space=sflag, size = 0x4, scoped, tag = 'scoped memory for vmamba_mamba_block.1']
    #allocation4 [shape = 's32[1]{0}', space=sflag, size = 0x4, scoped, tag = 'scoped memory for vmamba_mamba_block.1']
    #allocation5 [shape = 'u8[1024]{0}', space=vmem, size = 0x400, scoped, tag = 'input window, operand 1, single buffered']
    #allocation6 [shape = 's32[1]{0}', space=sflag, size = 0x4, scoped, tag = 'scoped memory for vmamba_mamba_block.1']
    #allocation7 [shape = 'u8[131072]{0}', space=vmem, size = 0x20000, scoped, tag = 'input window, operand 2, single buffered']
    #allocation8 [shape = 'u8[8192]{0}', space=vmem, size = 0x2000, scoped, tag = 'output window, operand 0, single buffered']
    %8 = vsyncpa [#allocation3], 0
    %9 = vsyncpa [#allocation6], 0
    %10 = vsyncpa [#allocation4], 0
    // Predicated region
    $region2: #{vmamba_mamba_block.1} parent=1 // pred_check
      _
    $region3: #{vmamba_mamba_block.1} parent=1 // pred_check_branch
      %12 = sbr.rel (0) target = $region5
    $region4: #{vmamba_mamba_block.1} parent=1 // pred_region
      %s14 = ssub.s32 256, 256
      %15 = vsyncadd [#allocation3], %s14
      %s16 = sshll.u32 [#allocation2], 4
      %s17 = int_to_ptr.vmem [resolvable:$true] %s16
      %22 = dma.hbm_to_vmem [thread:$0]  %s0, 256, %s17, [#allocation3], 128, 128, 8
    $region5: #{vmamba_mamba_block.1} parent=1 // pred_fallthru
      _
    // Predicated region
    $region6: #{vmamba_mamba_block.1} parent=1 // pred_check
      _
    $region7: #{vmamba_mamba_block.1} parent=1 // pred_check_branch
      %24 = sbr.rel (0) target = $region9
    $region8: #{vmamba_mamba_block.1} parent=1 // pred_region
      %s26 = ssub.s32 32, 32
      %27 = vsyncadd [#allocation6], %s26
      %s29 = sshll.u32 [#allocation5], 4
      %s30 = int_to_ptr.vmem [resolvable:$true] %s29
      %32 = dma.hbm_to_vmem [thread:$0]  %s1, 32, %s30, [#allocation6]
    $region9: #{vmamba_mamba_block.1} parent=1 // pred_fallthru
      _
    // Predicated region
    $region10: #{vmamba_mamba_block.1} parent=1 // pred_check
      _
    $region11: #{vmamba_mamba_block.1} parent=1 // pred_check_branch
      %34 = sbr.rel (0) target = $region13
    $region12: #{vmamba_mamba_block.1} parent=1 // pred_region
      %s36 = ssub.s32 4096, 4096
      %37 = vsyncadd [#allocation6], %s36
      %s38 = sshll.u32 [#allocation7], 4
      %s39 = int_to_ptr.vmem [resolvable:$true] %s38
      %44 = dma.hbm_to_vmem [thread:$0]  %s2, 4096, %s39, [#allocation6], 128, 128, 8
    $region13: #{vmamba_mamba_block.1} parent=1 // pred_fallthru
      _
    // Predicated region
    $region14: #{vmamba_mamba_block.1} parent=1 // pred_check
      _
    $region15: #{vmamba_mamba_block.1} parent=1 // pred_check_branch
      %46 = sbr.rel (0) target = $region17
    $region16: #{vmamba_mamba_block.1} parent=1 // pred_region
      %47 = dma.done [#allocation3], 256
    $region17: #{vmamba_mamba_block.1} parent=1 // pred_fallthru
      _
    // Predicated region
    $region18: #{vmamba_mamba_block.1} parent=1 // pred_check
      _
    $region19: #{vmamba_mamba_block.1} parent=1 // pred_check_branch
      %49 = sbr.rel (0) target = $region21
    $region20: #{vmamba_mamba_block.1} parent=1 // pred_region
      %50 = dma.done [#allocation6], 32
    $region21: #{vmamba_mamba_block.1} parent=1 // pred_fallthru
      _
    // Predicated region
    $region22: #{vmamba_mamba_block.1} parent=1 // pred_check
      _
    $region23: #{vmamba_mamba_block.1} parent=1 // pred_check_branch
      %52 = sbr.rel (0) target = $region25
    $region24: #{vmamba_mamba_block.1} parent=1 // pred_region
      %53 = dma.done [#allocation6], 4096
    $region25: #{vmamba_mamba_block.1} parent=1 // pred_fallthru
      _
    %v54 = vld [vmem:[#allocation2] sm:$0xff]
    %v55 = vld [vmem:[#allocation2 + $0x8] sm:$0xff]
    %v56 = vld [vmem:[#allocation5] sm:$0x3]
    %v57 = vld [vmem:[#allocation7] sm:$0xff]
    %v58 = vld [vmem:[#allocation7 + $0x8] sm:$0xff]
    %v59 = vld [vmem:[#allocation7 + $0x10] sm:$0xff]
    %v60 = vld [vmem:[#allocation7 + $0x18] sm:$0xff]
    %v61 = vld [vmem:[#allocation7 + $0x20] sm:$0xff]
    %v62 = vld [vmem:[#allocation7 + $0x28] sm:$0xff]
    %v63 = vld [vmem:[#allocation7 + $0x30] sm:$0xff]
    %v64 = vld [vmem:[#allocation7 + $0x38] sm:$0xff]
    %v65 = vld [vmem:[#allocation7 + $0x40] sm:$0xff]
    %v66 = vld [vmem:[#allocation7 + $0x48] sm:$0xff]
    %v67 = vld [vmem:[#allocation7 + $0x50] sm:$0xff]
    %v68 = vld [vmem:[#allocation7 + $0x58] sm:$0xff]
    %v69 = vld [vmem:[#allocation7 + $0x60] sm:$0xff]
    %v70 = vld [vmem:[#allocation7 + $0x68] sm:$0xff]
    %v71 = vld [vmem:[#allocation7 + $0x70] sm:$0xff]
    %v72 = vld [vmem:[#allocation7 + $0x78] sm:$0xff]
    %v73 = vld [vmem:[#allocation7 + $0x80] sm:$0xff]
    %v74 = vld [vmem:[#allocation7 + $0x88] sm:$0xff]
    %v75 = vld [vmem:[#allocation7 + $0x90] sm:$0xff]
    %v76 = vld [vmem:[#allocation7 + $0x98] sm:$0xff]
    %v77 = vld [vmem:[#allocation7 + $0xa0] sm:$0xff]
    %v78 = vld [vmem:[#allocation7 + $0xa8] sm:$0xff]
    %v79 = vld [vmem:[#allocation7 + $0xb0] sm:$0xff]
    %v80 = vld [vmem:[#allocation7 + $0xb8] sm:$0xff]
    %v81 = vld [vmem:[#allocation7 + $0xc0] sm:$0xff]
    %v82 = vld [vmem:[#allocation7 + $0xc8] sm:$0xff]
    %v83 = vld [vmem:[#allocation7 + $0xd0] sm:$0xff]
    %v84 = vld [vmem:[#allocation7 + $0xd8] sm:$0xff]
    %v85 = vld [vmem:[#allocation7 + $0xe0] sm:$0xf]
    %v86 = vld [vmem:[#allocation7 + $0xe8] sm:$0xff]
    %v87 = vld [vmem:[#allocation7 + $0xf0] sm:$0xf]
    %v88 = vld [vmem:[#allocation7 + $0xf8] sm:$0xff]
    %v89 = vxor.u32 %v56, 2147483648
    %v90 = vmul.f32 %v89, 1.442695
    %v91 = vpow.pop %v90
    %v92 = vadd.f32 %v91, 1.0
    %v93 = vrcp.pop %v92
    %v94 = vmul.f32 1.0, %v93
    %v95 = vmul.f32 %v56, %v94
    %v96 = vlaneseq
    %v97 = vshrl.u32 %v96, 7
    %v98 = vsub.s32 0, %v97
    %v99 = vrot.slane %v88, %v98
    %vm100 = vcmask 523264
    %v102 = vsel %vm100, %v95, 0
    %104 = vmatprep.subr.mxu0 0.0
    %105 = vmatpush1.msra.mxu0 0.0
    %106 = vmatprep.subr.mxu0 0.0
    %107 = vmatpush1.msra.mxu0 0.0
    %108 = vmatprep.subr.mxu0 0.0
    %109 = vmatpush1.msra.mxu0 0.0
    %110 = vmatprep.subr.mxu0 0.0
    %111 = vmatpush1.msra.mxu0 0.0
    %112 = vmatprep.subr.mxu0 0.0
    %113 = vmatpush1.msra.mxu0 0.0
    %114 = vmatprep.subr.mxu0 0.0
    %115 = vmatpush1.msra.mxu0 0.0
    %116 = vmatprep.subr.mxu0 0.0
    %117 = vmatpush1.msra.mxu0 0.0
    %118 = vmatprep.subr.mxu0 0.0
    %119 = vmatpush1.msra.mxu0 0.0
    %120 = vmatprep.subr.mxu0 0.0
    %121 = vmatpush1.msra.mxu0 %v64
    %122 = vmatprep.subr.mxu0 0.0
    %123 = vmatpush1.msra.mxu0 %v63
    %124 = vmatprep.subr.mxu0 0.0
    %125 = vmatpush1.msra.mxu0 %v62
    %126 = vmatprep.subr.mxu0 0.0
    %127 = vmatpush1.msra.mxu0 %v61
    %128 = vmatprep.subr.mxu0 0.0
    %129 = vmatpush1.msra.mxu0 %v60
    %130 = vmatprep.subr.mxu0 0.0
    %131 = vmatpush1.msra.mxu0 %v59
    %132 = vmatprep.subr.mxu0 0.0
    %133 = vmatpush1.msra.mxu0 %v58
    %134 = vmatprep.subr.mxu0 0.0
    %135 = vmatpush1.msra.mxu0 %v57
    %136 = vmatprep.subr.mxu0 0.0
    %137 = vmatpush2.msra.mxu0 0.0
    %138 = vmatprep.subr.mxu0 0.0
    %139 = vmatpush2.msra.mxu0 0.0
    %140 = vmatprep.subr.mxu0 0.0
    %141 = vmatpush2.msra.mxu0 0.0
    %142 = vmatprep.subr.mxu0 0.0
    %143 = vmatpush2.msra.mxu0 0.0
    %144 = vmatprep.subr.mxu0 0.0
    %145 = vmatpush2.msra.mxu0 0.0
    %146 = vmatprep.subr.mxu0 0.0
    %147 = vmatpush2.msra.mxu0 0.0
    %148 = vmatprep.subr.mxu0 0.0
    %149 = vmatpush2.msra.mxu0 0.0
    %150 = vmatprep.subr.mxu0 0.0
    %151 = vmatpush2.msra.mxu0 0.0
    %152 = vmatprep.subr.mxu0 0.0
    %153 = vmatpush2.msra.mxu0 0.0
    %154 = vmatprep.subr.mxu0 0.0
    %155 = vmatpush2.msra.mxu0 0.0
    %156 = vmatprep.subr.mxu0 0.0
    %157 = vmatpush2.msra.mxu0 0.0
    %158 = vmatprep.subr.mxu0 0.0
    %159 = vmatpush2.msra.mxu0 0.0
    %160 = vmatprep.subr.mxu0 0.0
    %161 = vmatpush2.msra.mxu0 0.0
    %162 = vmatprep.subr.mxu0 0.0
    %163 = vmatpush2.msra.mxu0 0.0
    %164 = vmatprep.subr.mxu0 0.0
    %165 = vmatpush2.msra.mxu0 0.0
    %166 = vmatprep.subr.mxu0 0.0
    %167 = vmatpush2.msra.mxu0 0.0
    %168 = vmatprep.mubr.f32.mxu0 0.0
    %169 = vmatmul.mubr.f32.gmra.mxu0 %v102
    %v170 = vpop.f32.mrf.mxu0
    %v171 = vadd.f32 %v99, %v170
    %v172 = vpop.f32.mrf.mxu0
    %173 = vdwg.mxu0
    %vm174 = vcmask 261120
    %v175 = vsel %vm174, %v54, 0.0
    %176 = vadd.xlane.f32.xlu0 %v175
    %v177 = vpop.xlane.xlu0 %176
    %v178 = vsel %vm174, %v55, 0.0
    %179 = vadd.xlane.f32.xlu0 %v178
    %v180 = vpop.xlane.xlu0 %179
    %v181 = vrcp.pop 32.0
    %v182 = vmul.f32 %v177, %v181
    %v183 = vmul.f32 %v180, %v181
    %v184 = vsub.f32 %v54, %v182
    %v185 = vsub.f32 %v55, %v183
    %v186 = vmul.f32 %v184, %v184
    %v187 = vmul.f32 %v185, %v185
    %v188 = vsel %vm174, %v186, 0.0
    %189 = vadd.xlane.f32.xlu0 %v188
    %v190 = vpop.xlane.xlu0 %189
    %v191 = vsel %vm174, %v187, 0.0
    %192 = vadd.xlane.f32.xlu0 %v191
    %v193 = vpop.xlane.xlu0 %192
    %v194 = vmul.f32 %v190, %v181
    %v195 = vmul.f32 %v193, %v181
    %v196 = vadd.f32 %v194, 1e-05
    %v197 = vadd.f32 %v195, 1e-05
    %v198 = vrsqrt.pop %v196
    %v199 = vrsqrt.pop %v197
    %v200 = vmul.f32 %v184, %v198
    %v201 = vmul.f32 %v185, %v199
    %v202 = vlaneseq
    %v203 = vshrl.u32 %v202, 7
    %v204 = vsub.s32 1, %v203
    %v205 = vrot.slane %v88, %v204
    %v206 = vmul.f32 %v200, %v205
    %v207 = vmul.f32 %v201, %v205
    %v208 = vlaneseq
    %v209 = vshrl.u32 %v208, 7
    %v210 = vsub.s32 2, %v209
    %v211 = vrot.slane %v88, %v210
    %v212 = vadd.f32 %v206, %v211
    %v213 = vadd.f32 %v207, %v211
    %v216 = vunpack.c.l.s4 1966171168
    %v217 = vunpack.c.0.s8 %v216
    %v218 = vlaneseq
    %v219 = vshrl.u32 %v218, 7
    %v220 = vsub.s32 %v217, %v219
    %v221 = vrot.slane %v171, %v220
    %v222 = vcombine.high %v221, %v221
    %v224 = vunpack.c.l.s4 1966171168
    %v225 = vunpack.c.0.s8 %v224
    %v226 = vlaneseq
    %v227 = vshrl.u32 %v226, 7
    %v228 = vsub.s32 %v225, %v227
    %v229 = vrot.slane %v221, %v228
    %v231 = vunpack.c.l.s4 1966171168
    %v232 = vunpack.c.0.s8 %v231
    %v233 = vlaneseq
    %v234 = vshrl.u32 %v233, 7
    %v235 = vsub.s32 %v232, %v234
    %v236 = vrot.slane %v222, %v235
    %v239 = vadd.f32 %v229, 1.0
    %v240 = vadd.f32 %v236, 1.0
    %v243 = vlaneseq
    %v244 = vshrl.u32 %v243, 7
    %v245 = vsub.s32 0, %v244
    %v246 = vrot.slane %v239, %v245
    %v247 = vlaneseq
    %v248 = vshrl.u32 %v247, 7
    %v249 = vsub.s32 0, %v248
    %v250 = vrot.slane %v240, %v249
    %251 = vrot.lane.b32.xlu0 %v246, 96
    %v252 = vpop.permute.xlu0 %251
    %253 = vrot.lane.b32.xlu0 %v250, 96
    %v254 = vpop.permute.xlu0 %253
    %v257 = vmul.f32 %v212, %v252
    %v258 = vmul.f32 %v213, %v254
    %v259 = vlaneseq
    %v260 = vshrl.u32 %v259, 7
    %v261 = vsub.s32 0, %v260
    %v262 = vrot.slane %v229, %v261
    %v263 = vlaneseq
    %v264 = vshrl.u32 %v263, 7
    %v265 = vsub.s32 0, %v264
    %v266 = vrot.slane %v236, %v265
    %v269 = vadd.f32 %v257, %v262
    %v270 = vadd.f32 %v258, %v266
    %v272 = vsel %vm174, %v269, 0
    %v275 = vsel %vm174, %v270, 0
    %277 = vmatprep.subr.mxu0 0.0
    %278 = vmatpush1.msra.mxu0 0.0
    %279 = vmatprep.subr.mxu0 0.0
    %280 = vmatpush1.msra.mxu0 0.0
    %281 = vmatprep.subr.mxu0 0.0
    %282 = vmatpush1.msra.mxu0 0.0
    %283 = vmatprep.subr.mxu0 0.0
    %284 = vmatpush1.msra.mxu0 0.0
    %285 = vmatprep.subr.mxu0 0.0
    %286 = vmatpush1.msra.mxu0 0.0
    %287 = vmatprep.subr.mxu0 0.0
    %288 = vmatpush1.msra.mxu0 0.0
    %289 = vmatprep.subr.mxu0 0.0
    %290 = vmatpush1.msra.mxu0 0.0
    %291 = vmatprep.subr.mxu0 0.0
    %292 = vmatpush1.msra.mxu0 0.0
    %293 = vmatprep.subr.mxu0 0.0
    %294 = vmatpush1.msra.mxu0 0.0
    %295 = vmatprep.subr.mxu0 0.0
    %296 = vmatpush1.msra.mxu0 0.0
    %297 = vmatprep.subr.mxu0 0.0
    %298 = vmatpush1.msra.mxu0 0.0
    %299 = vmatprep.subr.mxu0 0.0
    %300 = vmatpush1.msra.mxu0 0.0
    %301 = vmatprep.subr.mxu0 0.0
    %302 = vmatpush1.msra.mxu0 %v68
    %303 = vmatprep.subr.mxu0 0.0
    %304 = vmatpush1.msra.mxu0 %v67
    %305 = vmatprep.subr.mxu0 0.0
    %306 = vmatpush1.msra.mxu0 %v66
    %307 = vmatprep.subr.mxu0 0.0
    %308 = vmatpush1.msra.mxu0 %v65
    %309 = vmatprep.subr.mxu0 0.0
    %310 = vmatpush2.msra.mxu0 0.0
    %311 = vmatprep.subr.mxu0 0.0
    %312 = vmatpush2.msra.mxu0 0.0
    %313 = vmatprep.subr.mxu0 0.0
    %314 = vmatpush2.msra.mxu0 0.0
    %315 = vmatprep.subr.mxu0 0.0
    %316 = vmatpush2.msra.mxu0 0.0
    %317 = vmatprep.subr.mxu0 0.0
    %318 = vmatpush2.msra.mxu0 0.0
    %319 = vmatprep.subr.mxu0 0.0
    %320 = vmatpush2.msra.mxu0 0.0
    %321 = vmatprep.subr.mxu0 0.0
    %322 = vmatpush2.msra.mxu0 0.0
    %323 = vmatprep.subr.mxu0 0.0
    %324 = vmatpush2.msra.mxu0 0.0
    %325 = vmatprep.subr.mxu0 0.0
    %326 = vmatpush2.msra.mxu0 0.0
    %327 = vmatprep.subr.mxu0 0.0
    %328 = vmatpush2.msra.mxu0 0.0
    %329 = vmatprep.subr.mxu0 0.0
    %330 = vmatpush2.msra.mxu0 0.0
    %331 = vmatprep.subr.mxu0 0.0
    %332 = vmatpush2.msra.mxu0 0.0
    %333 = vmatprep.subr.mxu0 0.0
    %334 = vmatpush2.msra.mxu0 0.0
    %335 = vmatprep.subr.mxu0 0.0
    %336 = vmatpush2.msra.mxu0 0.0
    %337 = vmatprep.subr.mxu0 0.0
    %338 = vmatpush2.msra.mxu0 0.0
    %339 = vmatprep.subr.mxu0 0.0
    %340 = vmatpush2.msra.mxu0 0.0
    %341 = vmatprep.mubr.f32.mxu0 0.0
    %342 = vmatmul.mubr.f32.gmra.mxu0 %v272
    %v343 = vpop.f32.mrf.mxu0
    %v344 = vadd.f32 0.0, %v343
    %v345 = vpop.f32.mrf.mxu0
    %346 = vmatprep.mubr.f32.mxu0 0.0
    %347 = vmatmul.mubr.f32.gmra.mxu0 %v275
    %v348 = vpop.f32.mrf.mxu0
    %v349 = vadd.f32 0.0, %v348
    %v350 = vpop.f32.mrf.mxu0
    %351 = vdwg.mxu0
    %v352 = vlaneseq
    %v353 = vshrl.u32 %v352, 7
    %v354 = vsub.s32 3, %v353
    %v355 = vrot.slane %v87, %v354
    %v356 = vmul.f32 %v344, %v355
    %v357 = vmul.f32 %v349, %v355
    %v358 = vlaneseq
    %v359 = vshrl.u32 %v358, 7
    %v360 = vsub.s32 3, %v359
    %v361 = vrot.slane %v88, %v360
    %v362 = vadd.f32 %v356, %v361
    %v363 = vadd.f32 %v357, %v361
    %v366 = vrot.slane %v344, 7
    %v367 = vrot.slane %v349, 7
    %vm370 = vcmask 1040384
    %v371 = vsel %vm370, 0.0, %v366
    %v372 = vsel %vm370, 0.0, %v367
    %v373 = vlaneseq
    %v374 = vshrl.u32 %v373, 7
    %v375 = vsub.s32 2, %v374
    %v376 = vrot.slane %v87, %v375
    %v377 = vmul.f32 %v371, %v376
    %v378 = vmul.f32 %v372, %v376
    %v379 = vadd.f32 %v362, %v377
    %v380 = vadd.f32 %v363, %v378
    %v381 = vrot.slane %v344, 6
    %v382 = vrot.slane %v349, 6
    %vm385 = vcmask 1041408
    %v386 = vsel %vm385, 0.0, %v381
    %v387 = vsel %vm385, 0.0, %v382
    %v388 = vlaneseq
    %v389 = vshrl.u32 %v388, 7
    %v390 = vsub.s32 1, %v389
    %v391 = vrot.slane %v87, %v390
    %v392 = vmul.f32 %v386, %v391
    %v393 = vmul.f32 %v387, %v391
    %v394 = vadd.f32 %v379, %v392
    %v395 = vadd.f32 %v380, %v393
    %v396 = vrot.slane %v344, 5
    %v397 = vrot.slane %v349, 5
    %vm400 = vcmask 1042432
    %v401 = vsel %vm400, 0.0, %v396
    %v402 = vsel %vm400, 0.0, %v397
    %v403 = vlaneseq
    %v404 = vshrl.u32 %v403, 7
    %v405 = vsub.s32 0, %v404
    %v406 = vrot.slane %v87, %v405
    %v407 = vmul.f32 %v401, %v406
    %v408 = vmul.f32 %v402, %v406
    %v409 = vadd.f32 %v394, %v407
    %v410 = vadd.f32 %v395, %v408
    %v411 = vxor.u32 %v409, 2147483648
    %v412 = vxor.u32 %v410, 2147483648
    %v413 = vmul.f32 %v411, 1.442695
    %v414 = vpow.pop %v413
    %v415 = vmul.f32 %v412, 1.442695
    %v416 = vpow.pop %v415
    %v417 = vadd.f32 %v414, 1.0
    %v418 = vadd.f32 %v416, 1.0
    %v419 = vrcp.pop %v417
    %v420 = vmul.f32 1.0, %v419
    %v421 = vrcp.pop %v418
    %v422 = vmul.f32 1.0, %v421
    %v423 = vmul.f32 %v409, %v420
    %v424 = vmul.f32 %v410, %v422
    %v426 = vsel %vm100, %v423, 0
    %v429 = vsel %vm100, %v424, 0
    %431 = vmatprep.subr.mxu0 0.0
    %432 = vmatpush1.msra.mxu0 0.0
    %433 = vmatprep.subr.mxu0 0.0
    %434 = vmatpush1.msra.mxu0 0.0
    %435 = vmatprep.subr.mxu0 0.0
    %436 = vmatpush1.msra.mxu0 0.0
    %437 = vmatprep.subr.mxu0 0.0
    %438 = vmatpush1.msra.mxu0 0.0
    %439 = vmatprep.subr.mxu0 0.0
    %440 = vmatpush1.msra.mxu0 0.0
    %441 = vmatprep.subr.mxu0 0.0
    %442 = vmatpush1.msra.mxu0 0.0
    %443 = vmatprep.subr.mxu0 0.0
    %444 = vmatpush1.msra.mxu0 0.0
    %445 = vmatprep.subr.mxu0 0.0
    %446 = vmatpush1.msra.mxu0 0.0
    %447 = vmatprep.subr.mxu0 0.0
    %448 = vmatpush1.msra.mxu0 %v76
    %449 = vmatprep.subr.mxu0 0.0
    %450 = vmatpush1.msra.mxu0 %v75
    %451 = vmatprep.subr.mxu0 0.0
    %452 = vmatpush1.msra.mxu0 %v74
    %453 = vmatprep.subr.mxu0 0.0
    %454 = vmatpush1.msra.mxu0 %v73
    %455 = vmatprep.subr.mxu0 0.0
    %456 = vmatpush1.msra.mxu0 %v72
    %457 = vmatprep.subr.mxu0 0.0
    %458 = vmatpush1.msra.mxu0 %v71
    %459 = vmatprep.subr.mxu0 0.0
    %460 = vmatpush1.msra.mxu0 %v70
    %461 = vmatprep.subr.mxu0 0.0
    %462 = vmatpush1.msra.mxu0 %v69
    %463 = vmatprep.subr.mxu0 0.0
    %464 = vmatpush2.msra.mxu0 0.0
    %465 = vmatprep.subr.mxu0 0.0
    %466 = vmatpush2.msra.mxu0 0.0
    %467 = vmatprep.subr.mxu0 0.0
    %468 = vmatpush2.msra.mxu0 0.0
    %469 = vmatprep.subr.mxu0 0.0
    %470 = vmatpush2.msra.mxu0 0.0
    %471 = vmatprep.subr.mxu0 0.0
    %472 = vmatpush2.msra.mxu0 0.0
    %473 = vmatprep.subr.mxu0 0.0
    %474 = vmatpush2.msra.mxu0 0.0
    %475 = vmatprep.subr.mxu0 0.0
    %476 = vmatpush2.msra.mxu0 0.0
    %477 = vmatprep.subr.mxu0 0.0
    %478 = vmatpush2.msra.mxu0 0.0
    %479 = vmatprep.subr.mxu0 0.0
    %480 = vmatpush2.msra.mxu0 0.0
    %481 = vmatprep.subr.mxu0 0.0
    %482 = vmatpush2.msra.mxu0 0.0
    %483 = vmatprep.subr.mxu0 0.0
    %484 = vmatpush2.msra.mxu0 0.0
    %485 = vmatprep.subr.mxu0 0.0
    %486 = vmatpush2.msra.mxu0 0.0
    %487 = vmatprep.subr.mxu0 0.0
    %488 = vmatpush2.msra.mxu0 0.0
    %489 = vmatprep.subr.mxu0 0.0
    %490 = vmatpush2.msra.mxu0 0.0
    %491 = vmatprep.subr.mxu0 0.0
    %492 = vmatpush2.msra.mxu0 0.0
    %493 = vmatprep.subr.mxu0 0.0
    %494 = vmatpush2.msra.mxu0 0.0
    %495 = vmatprep.mubr.f32.mxu0 0.0
    %496 = vmatmul.mubr.f32.gmra.mxu0 %v426
    %v497 = vpop.f32.mrf.mxu0
    %v498 = vadd.f32 0.0, %v497
    %v499 = vpop.f32.mrf.mxu0
    %500 = vmatprep.mubr.f32.mxu0 0.0
    %501 = vmatmul.mubr.f32.gmra.mxu0 %v429
    %v502 = vpop.f32.mrf.mxu0
    %v503 = vadd.f32 0.0, %v502
    %v504 = vpop.f32.mrf.mxu0
    %505 = vdwg.mxu0
    %v506 = vlaneseq
    %v507 = vshrl.u32 %v506, 7
    %v508 = vsub.s32 4, %v507
    %v509 = vrot.slane %v88, %v508
    %vm510 = vcmask 31744
    %v512 = vsel %vm510, %v498, 0
    %v515 = vsel %vm510, %v503, 0
    %vm517 = vcmask 1043456
    %v519 = vsel %vm517, %v85, 0
    %521 = vmatprep.subr.mxu0 0.0
    %522 = vmatpush1.msra.mxu0 0.0
    %523 = vmatprep.subr.mxu0 0.0
    %524 = vmatpush1.msra.mxu0 0.0
    %525 = vmatprep.subr.mxu0 0.0
    %526 = vmatpush1.msra.mxu0 0.0
    %527 = vmatprep.subr.mxu0 0.0
    %528 = vmatpush1.msra.mxu0 0.0
    %529 = vmatprep.subr.mxu0 0.0
    %530 = vmatpush1.msra.mxu0 0.0
    %531 = vmatprep.subr.mxu0 0.0
    %532 = vmatpush1.msra.mxu0 0.0
    %533 = vmatprep.subr.mxu0 0.0
    %534 = vmatpush1.msra.mxu0 0.0
    %535 = vmatprep.subr.mxu0 0.0
    %536 = vmatpush1.msra.mxu0 0.0
    %537 = vmatprep.subr.mxu0 0.0
    %538 = vmatpush1.msra.mxu0 0.0
    %539 = vmatprep.subr.mxu0 0.0
    %540 = vmatpush1.msra.mxu0 0.0
    %541 = vmatprep.subr.mxu0 0.0
    %542 = vmatpush1.msra.mxu0 0.0
    %543 = vmatprep.subr.mxu0 0.0
    %544 = vmatpush1.msra.mxu0 0.0
    %545 = vmatprep.subr.mxu0 0.0
    %546 = vmatpush1.msra.mxu0 0.0
    %547 = vmatprep.subr.mxu0 0.0
    %548 = vmatpush1.msra.mxu0 0.0
    %549 = vmatprep.subr.mxu0 0.0
    %550 = vmatpush1.msra.mxu0 0.0
    %551 = vmatprep.subr.mxu0 0.0
    %552 = vmatpush1.msra.mxu0 %v519
    %553 = vmatprep.subr.mxu0 0.0
    %554 = vmatpush2.msra.mxu0 0.0
    %555 = vmatprep.subr.mxu0 0.0
    %556 = vmatpush2.msra.mxu0 0.0
    %557 = vmatprep.subr.mxu0 0.0
    %558 = vmatpush2.msra.mxu0 0.0
    %559 = vmatprep.subr.mxu0 0.0
    %560 = vmatpush2.msra.mxu0 0.0
    %561 = vmatprep.subr.mxu0 0.0
    %562 = vmatpush2.msra.mxu0 0.0
    %563 = vmatprep.subr.mxu0 0.0
    %564 = vmatpush2.msra.mxu0 0.0
    %565 = vmatprep.subr.mxu0 0.0
    %566 = vmatpush2.msra.mxu0 0.0
    %567 = vmatprep.subr.mxu0 0.0
    %568 = vmatpush2.msra.mxu0 0.0
    %569 = vmatprep.subr.mxu0 0.0
    %570 = vmatpush2.msra.mxu0 0.0
    %571 = vmatprep.subr.mxu0 0.0
    %572 = vmatpush2.msra.mxu0 0.0
    %573 = vmatprep.subr.mxu0 0.0
    %574 = vmatpush2.msra.mxu0 0.0
    %575 = vmatprep.subr.mxu0 0.0
    %576 = vmatpush2.msra.mxu0 0.0
    %577 = vmatprep.subr.mxu0 0.0
    %578 = vmatpush2.msra.mxu0 0.0
    %579 = vmatprep.subr.mxu0 0.0
    %580 = vmatpush2.msra.mxu0 0.0
    %581 = vmatprep.subr.mxu0 0.0
    %582 = vmatpush2.msra.mxu0 0.0
    %583 = vmatprep.subr.mxu0 0.0
    %584 = vmatpush2.msra.mxu0 0.0
    %585 = vmatprep.mubr.f32.mxu0 0.0
    %586 = vmatmul.mubr.f32.gmra.mxu0 %v512
    %v587 = vpop.f32.mrf.mxu0
    %v588 = vadd.f32 %v509, %v587
    %v589 = vpop.f32.mrf.mxu0
    %590 = vmatprep.mubr.f32.mxu0 0.0
    %591 = vmatmul.mubr.f32.gmra.mxu0 %v515
    %v592 = vpop.f32.mrf.mxu0
    %v593 = vadd.f32 %v509, %v592
    %v594 = vpop.f32.mrf.mxu0
    %595 = vdwg.mxu0
    %v596 = vmax.f32 %v588, 0.0
    %v597 = vmax.f32 %v593, 0.0
    %v598 = vand.u32 2147483647, %v588
    %v599 = vand.u32 2147483647, %v593
    %v600 = vsub.f32 0.0, %v598
    %v601 = vsub.f32 0.0, %v599
    %v602 = vmul.f32 %v600, 1.442695
    %v603 = vpow.pop %v602
    %v604 = vmul.f32 %v601, 1.442695
    %v605 = vpow.pop %v604
    %v606 = vadd.f32 %v603, 1.0
    %v607 = vlog2.pop %v606
    %v608 = vmul.f32 %v607, 0.6931472
    %v609 = vmul.f32 -0.5, %v603
    %v610 = vadd.f32 %v609, 1.0
    %v611 = vmul.f32 %v610, %v603
    %v612 = vand.u32 2147483647, %v603
    %vm613 = vcmp.lt.f32.partialorder %v612, 0.0004427343
    %v614 = vsel %vm613, %v611, %v608
    %v615 = vadd.f32 %v605, 1.0
    %v616 = vlog2.pop %v615
    %v617 = vmul.f32 %v616, 0.6931472
    %v618 = vmul.f32 -0.5, %v605
    %v619 = vadd.f32 %v618, 1.0
    %v620 = vmul.f32 %v619, %v605
    %v621 = vand.u32 2147483647, %v605
    %vm622 = vcmp.lt.f32.partialorder %v621, 0.0004427343
    %v623 = vsel %vm622, %v620, %v617
    %v624 = vadd.f32 %v596, %v614
    %v625 = vadd.f32 %v597, %v623
    %v626 = vmul.f32 %v86, 1.442695
    %v627 = vpow.pop %v626
    %v628 = vsub.f32 0.0, %v627
    %v631 = vcombine.high %v624, %v624
    %v633 = vunpack.c.l.s4 1966171168
    %v634 = vunpack.c.0.s8 %v633
    %v635 = vlaneseq
    %v636 = vshrl.u32 %v635, 7
    %v637 = vsub.s32 %v634, %v636
    %v638 = vrot.slane %v624, %v637
    %v640 = vunpack.c.l.s4 1966171168
    %v641 = vunpack.c.0.s8 %v640
    %v642 = vlaneseq
    %v643 = vshrl.u32 %v642, 7
    %v644 = vsub.s32 %v641, %v643
    %v645 = vrot.slane %v631, %v644
    %v646 = vcombine.high %v638, %v638
    %v647 = vcombine.high %v645, %v645
    %v649 = vunpack.c.l.s4 1966171168
    %v650 = vunpack.c.0.s8 %v649
    %v651 = vlaneseq
    %v652 = vshrl.u32 %v651, 7
    %v653 = vsub.s32 %v650, %v652
    %v654 = vrot.slane %v638, %v653
    %v656 = vunpack.c.l.s4 1966171168
    %v657 = vunpack.c.0.s8 %v656
    %v658 = vlaneseq
    %v659 = vshrl.u32 %v658, 7
    %v660 = vsub.s32 %v657, %v659
    %v661 = vrot.slane %v645, %v660
    %v663 = vunpack.c.l.s4 1966171168
    %v664 = vunpack.c.0.s8 %v663
    %v665 = vlaneseq
    %v666 = vshrl.u32 %v665, 7
    %v667 = vsub.s32 %v664, %v666
    %v668 = vrot.slane %v646, %v667
    %v670 = vunpack.c.l.s4 1966171168
    %v671 = vunpack.c.0.s8 %v670
    %v672 = vlaneseq
    %v673 = vshrl.u32 %v672, 7
    %v674 = vsub.s32 %v671, %v673
    %v675 = vrot.slane %v647, %v674
    %v676 = vcombine.high %v654, %v654
    %v677 = vcombine.high %v661, %v661
    %v678 = vcombine.high %v668, %v668
    %v679 = vcombine.high %v675, %v675
    %v680 = vcombine.high %v625, %v625
    %v682 = vunpack.c.l.s4 1966171168
    %v683 = vunpack.c.0.s8 %v682
    %v684 = vlaneseq
    %v685 = vshrl.u32 %v684, 7
    %v686 = vsub.s32 %v683, %v685
    %v687 = vrot.slane %v625, %v686
    %v689 = vunpack.c.l.s4 1966171168
    %v690 = vunpack.c.0.s8 %v689
    %v691 = vlaneseq
    %v692 = vshrl.u32 %v691, 7
    %v693 = vsub.s32 %v690, %v692
    %v694 = vrot.slane %v680, %v693
    %v695 = vcombine.high %v687, %v687
    %v696 = vcombine.high %v694, %v694
    %v698 = vunpack.c.l.s4 1966171168
    %v699 = vunpack.c.0.s8 %v698
    %v700 = vlaneseq
    %v701 = vshrl.u32 %v700, 7
    %v702 = vsub.s32 %v699, %v701
    %v703 = vrot.slane %v687, %v702
    %v705 = vunpack.c.l.s4 1966171168
    %v706 = vunpack.c.0.s8 %v705
    %v707 = vlaneseq
    %v708 = vshrl.u32 %v707, 7
    %v709 = vsub.s32 %v706, %v708
    %v710 = vrot.slane %v694, %v709
    %v712 = vunpack.c.l.s4 1966171168
    %v713 = vunpack.c.0.s8 %v712
    %v714 = vlaneseq
    %v715 = vshrl.u32 %v714, 7
    %v716 = vsub.s32 %v713, %v715
    %v717 = vrot.slane %v695, %v716
    %v719 = vunpack.c.l.s4 1966171168
    %v720 = vunpack.c.0.s8 %v719
    %v721 = vlaneseq
    %v722 = vshrl.u32 %v721, 7
    %v723 = vsub.s32 %v720, %v722
    %v724 = vrot.slane %v696, %v723
    %v725 = vcombine.high %v703, %v703
    %v726 = vcombine.high %v710, %v710
    %v727 = vcombine.high %v717, %v717
    %v728 = vcombine.high %v724, %v724
    %v729 = vlaneseq
    %v730 = vshrl.u32 %v729, 7
    %v731 = vsub.s32 0, %v730
    %v732 = vrot.slane %v654, %v731
    %v733 = vlaneseq
    %v734 = vshrl.u32 %v733, 7
    %v735 = vsub.s32 0, %v734
    %v736 = vrot.slane %v668, %v735
    %v737 = vlaneseq
    %v738 = vshrl.u32 %v737, 7
    %v739 = vsub.s32 0, %v738
    %v740 = vrot.slane %v676, %v739
    %v741 = vlaneseq
    %v742 = vshrl.u32 %v741, 7
    %v743 = vsub.s32 0, %v742
    %v744 = vrot.slane %v678, %v743
    %v745 = vlaneseq
    %v746 = vshrl.u32 %v745, 7
    %v747 = vsub.s32 0, %v746
    %v748 = vrot.slane %v661, %v747
    %v749 = vlaneseq
    %v750 = vshrl.u32 %v749, 7
    %v751 = vsub.s32 0, %v750
    %v752 = vrot.slane %v675, %v751
    %v753 = vlaneseq
    %v754 = vshrl.u32 %v753, 7
    %v755 = vsub.s32 0, %v754
    %v756 = vrot.slane %v677, %v755
    %v757 = vlaneseq
    %v758 = vshrl.u32 %v757, 7
    %v759 = vsub.s32 0, %v758
    %v760 = vrot.slane %v679, %v759
    %v761 = vlaneseq
    %v762 = vshrl.u32 %v761, 7
    %v763 = vsub.s32 0, %v762
    %v764 = vrot.slane %v703, %v763
    %v765 = vlaneseq
    %v766 = vshrl.u32 %v765, 7
    %v767 = vsub.s32 0, %v766
    %v768 = vrot.slane %v717, %v767
    %v769 = vlaneseq
    %v770 = vshrl.u32 %v769, 7
    %v771 = vsub.s32 0, %v770
    %v772 = vrot.slane %v725, %v771
    %v773 = vlaneseq
    %v774 = vshrl.u32 %v773, 7
    %v775 = vsub.s32 0, %v774
    %v776 = vrot.slane %v727, %v775
    %v777 = vlaneseq
    %v778 = vshrl.u32 %v777, 7
    %v779 = vsub.s32 0, %v778
    %v780 = vrot.slane %v710, %v779
    %v781 = vlaneseq
    %v782 = vshrl.u32 %v781, 7
    %v783 = vsub.s32 0, %v782
    %v784 = vrot.slane %v724, %v783
    %v785 = vlaneseq
    %v786 = vshrl.u32 %v785, 7
    %v787 = vsub.s32 0, %v786
    %v788 = vrot.slane %v726, %v787
    %v789 = vlaneseq
    %v790 = vshrl.u32 %v789, 7
    %v791 = vsub.s32 0, %v790
    %v792 = vrot.slane %v728, %v791
    %v809 = vmul.f32 %v732, %v628
    %v810 = vmul.f32 %v736, %v628
    %v811 = vmul.f32 %v740, %v628
    %v812 = vmul.f32 %v744, %v628
    %v813 = vmul.f32 %v748, %v628
    %v814 = vmul.f32 %v752, %v628
    %v815 = vmul.f32 %v756, %v628
    %v816 = vmul.f32 %v760, %v628
    %v817 = vmul.f32 %v764, %v628
    %v818 = vmul.f32 %v768, %v628
    %v819 = vmul.f32 %v772, %v628
    %v820 = vmul.f32 %v776, %v628
    %v821 = vmul.f32 %v780, %v628
    %v822 = vmul.f32 %v784, %v628
    %v823 = vmul.f32 %v788, %v628
    %v824 = vmul.f32 %v792, %v628
    %v825 = vmul.f32 %v809, 1.442695
    %v826 = vpow.pop %v825
    %v827 = vmul.f32 %v810, 1.442695
    %v828 = vpow.pop %v827
    %v829 = vmul.f32 %v811, 1.442695
    %v830 = vpow.pop %v829
    %v831 = vmul.f32 %v812, 1.442695
    %v832 = vpow.pop %v831
    %v833 = vmul.f32 %v813, 1.442695
    %v834 = vpow.pop %v833
    %v835 = vmul.f32 %v814, 1.442695
    %v836 = vpow.pop %v835
    %v837 = vmul.f32 %v815, 1.442695
    %v838 = vpow.pop %v837
    %v839 = vmul.f32 %v816, 1.442695
    %v840 = vpow.pop %v839
    %v841 = vmul.f32 %v817, 1.442695
    %v842 = vpow.pop %v841
    %v843 = vmul.f32 %v818, 1.442695
    %v844 = vpow.pop %v843
    %v845 = vmul.f32 %v819, 1.442695
    %v846 = vpow.pop %v845
    %v847 = vmul.f32 %v820, 1.442695
    %v848 = vpow.pop %v847
    %v849 = vmul.f32 %v821, 1.442695
    %v850 = vpow.pop %v849
    %v851 = vmul.f32 %v822, 1.442695
    %v852 = vpow.pop %v851
    %v853 = vmul.f32 %v823, 1.442695
    %v854 = vpow.pop %v853
    %v855 = vmul.f32 %v824, 1.442695
    %v856 = vpow.pop %v855
    %v857 = vlaneseq
    %v858 = vshrl.u32 %v857, 7
    %v859 = vsub.s32 0, %v858
    %v860 = vrot.slane %v498, %v859
    %s862 = sor.u32 256, 4
    %863 = vbcast.lane.b32.xlu0 %v860, %s862
    %v864 = vpop.permute.xlu0 %863
    %v865 = vlaneseq
    %v866 = vshrl.u32 %v865, 7
    %v867 = vsub.s32 1, %v866
    %v868 = vrot.slane %v498, %v867
    %s870 = sor.u32 256, 4
    %871 = vbcast.lane.b32.xlu0 %v868, %s870
    %v872 = vpop.permute.xlu0 %871
    %v873 = vlaneseq
    %v874 = vshrl.u32 %v873, 7
    %v875 = vsub.s32 2, %v874
    %v876 = vrot.slane %v498, %v875
    %s878 = sor.u32 256, 4
    %879 = vbcast.lane.b32.xlu0 %v876, %s878
    %v880 = vpop.permute.xlu0 %879
    %v881 = vlaneseq
    %v882 = vshrl.u32 %v881, 7
    %v883 = vsub.s32 3, %v882
    %v884 = vrot.slane %v498, %v883
    %s886 = sor.u32 256, 4
    %887 = vbcast.lane.b32.xlu0 %v884, %s886
    %v888 = vpop.permute.xlu0 %887
    %v889 = vlaneseq
    %v890 = vshrl.u32 %v889, 7
    %v891 = vsub.s32 4, %v890
    %v892 = vrot.slane %v498, %v891
    %s894 = sor.u32 256, 4
    %895 = vbcast.lane.b32.xlu0 %v892, %s894
    %v896 = vpop.permute.xlu0 %895
    %v897 = vlaneseq
    %v898 = vshrl.u32 %v897, 7
    %v899 = vsub.s32 5, %v898
    %v900 = vrot.slane %v498, %v899
    %s902 = sor.u32 256, 4
    %903 = vbcast.lane.b32.xlu0 %v900, %s902
    %v904 = vpop.permute.xlu0 %903
    %v905 = vlaneseq
    %v906 = vshrl.u32 %v905, 7
    %v907 = vsub.s32 6, %v906
    %v908 = vrot.slane %v498, %v907
    %s910 = sor.u32 256, 4
    %911 = vbcast.lane.b32.xlu0 %v908, %s910
    %v912 = vpop.permute.xlu0 %911
    %v913 = vlaneseq
    %v914 = vshrl.u32 %v913, 7
    %v915 = vsub.s32 7, %v914
    %v916 = vrot.slane %v498, %v915
    %s918 = sor.u32 256, 4
    %919 = vbcast.lane.b32.xlu0 %v916, %s918
    %v920 = vpop.permute.xlu0 %919
    %v921 = vlaneseq
    %v922 = vshrl.u32 %v921, 7
    %v923 = vsub.s32 0, %v922
    %v924 = vrot.slane %v503, %v923
    %s926 = sor.u32 256, 4
    %927 = vbcast.lane.b32.xlu0 %v924, %s926
    %v928 = vpop.permute.xlu0 %927
    %v929 = vlaneseq
    %v930 = vshrl.u32 %v929, 7
    %v931 = vsub.s32 1, %v930
    %v932 = vrot.slane %v503, %v931
    %s934 = sor.u32 256, 4
    %935 = vbcast.lane.b32.xlu0 %v932, %s934
    %v936 = vpop.permute.xlu0 %935
    %v937 = vlaneseq
    %v938 = vshrl.u32 %v937, 7
    %v939 = vsub.s32 2, %v938
    %v940 = vrot.slane %v503, %v939
    %s942 = sor.u32 256, 4
    %943 = vbcast.lane.b32.xlu0 %v940, %s942
    %v944 = vpop.permute.xlu0 %943
    %v945 = vlaneseq
    %v946 = vshrl.u32 %v945, 7
    %v947 = vsub.s32 3, %v946
    %v948 = vrot.slane %v503, %v947
    %s950 = sor.u32 256, 4
    %951 = vbcast.lane.b32.xlu0 %v948, %s950
    %v952 = vpop.permute.xlu0 %951
    %v953 = vlaneseq
    %v954 = vshrl.u32 %v953, 7
    %v955 = vsub.s32 4, %v954
    %v956 = vrot.slane %v503, %v955
    %s958 = sor.u32 256, 4
    %959 = vbcast.lane.b32.xlu0 %v956, %s958
    %v960 = vpop.permute.xlu0 %959
    %v961 = vlaneseq
    %v962 = vshrl.u32 %v961, 7
    %v963 = vsub.s32 5, %v962
    %v964 = vrot.slane %v503, %v963
    %s966 = sor.u32 256, 4
    %967 = vbcast.lane.b32.xlu0 %v964, %s966
    %v968 = vpop.permute.xlu0 %967
    %v969 = vlaneseq
    %v970 = vshrl.u32 %v969, 7
    %v971 = vsub.s32 6, %v970
    %v972 = vrot.slane %v503, %v971
    %s974 = sor.u32 256, 4
    %975 = vbcast.lane.b32.xlu0 %v972, %s974
    %v976 = vpop.permute.xlu0 %975
    %v977 = vlaneseq
    %v978 = vshrl.u32 %v977, 7
    %v979 = vsub.s32 7, %v978
    %v980 = vrot.slane %v503, %v979
    %s982 = sor.u32 256, 4
    %983 = vbcast.lane.b32.xlu0 %v980, %s982
    %v984 = vpop.permute.xlu0 %983
    %v985 = vmul.f32 %v624, %v423
    %v986 = vmul.f32 %v625, %v424
    %v989 = vcombine.high %v985, %v985
    %v991 = vunpack.c.l.s4 1966171168
    %v992 = vunpack.c.0.s8 %v991
    %v993 = vlaneseq
    %v994 = vshrl.u32 %v993, 7
    %v995 = vsub.s32 %v992, %v994
    %v996 = vrot.slane %v985, %v995
    %v998 = vunpack.c.l.s4 1966171168
    %v999 = vunpack.c.0.s8 %v998
    %v1000 = vlaneseq
    %v1001 = vshrl.u32 %v1000, 7
    %v1002 = vsub.s32 %v999, %v1001
    %v1003 = vrot.slane %v989, %v1002
    %v1004 = vcombine.high %v996, %v996
    %v1005 = vcombine.high %v1003, %v1003
    %v1007 = vunpack.c.l.s4 1966171168
    %v1008 = vunpack.c.0.s8 %v1007
    %v1009 = vlaneseq
    %v1010 = vshrl.u32 %v1009, 7
    %v1011 = vsub.s32 %v1008, %v1010
    %v1012 = vrot.slane %v996, %v1011
    %v1014 = vunpack.c.l.s4 1966171168
    %v1015 = vunpack.c.0.s8 %v1014
    %v1016 = vlaneseq
    %v1017 = vshrl.u32 %v1016, 7
    %v1018 = vsub.s32 %v1015, %v1017
    %v1019 = vrot.slane %v1003, %v1018
    %v1021 = vunpack.c.l.s4 1966171168
    %v1022 = vunpack.c.0.s8 %v1021
    %v1023 = vlaneseq
    %v1024 = vshrl.u32 %v1023, 7
    %v1025 = vsub.s32 %v1022, %v1024
    %v1026 = vrot.slane %v1004, %v1025
    %v1028 = vunpack.c.l.s4 1966171168
    %v1029 = vunpack.c.0.s8 %v1028
    %v1030 = vlaneseq
    %v1031 = vshrl.u32 %v1030, 7
    %v1032 = vsub.s32 %v1029, %v1031
    %v1033 = vrot.slane %v1005, %v1032
    %v1034 = vcombine.high %v1012, %v1012
    %v1035 = vcombine.high %v1019, %v1019
    %v1036 = vcombine.high %v1026, %v1026
    %v1037 = vcombine.high %v1033, %v1033
    %v1038 = vcombine.high %v986, %v986
    %v1040 = vunpack.c.l.s4 1966171168
    %v1041 = vunpack.c.0.s8 %v1040
    %v1042 = vlaneseq
    %v1043 = vshrl.u32 %v1042, 7
    %v1044 = vsub.s32 %v1041, %v1043
    %v1045 = vrot.slane %v986, %v1044
    %v1047 = vunpack.c.l.s4 1966171168
    %v1048 = vunpack.c.0.s8 %v1047
    %v1049 = vlaneseq
    %v1050 = vshrl.u32 %v1049, 7
    %v1051 = vsub.s32 %v1048, %v1050
    %v1052 = vrot.slane %v1038, %v1051
    %v1053 = vcombine.high %v1045, %v1045
    %v1054 = vcombine.high %v1052, %v1052
    %v1056 = vunpack.c.l.s4 1966171168
    %v1057 = vunpack.c.0.s8 %v1056
    %v1058 = vlaneseq
    %v1059 = vshrl.u32 %v1058, 7
    %v1060 = vsub.s32 %v1057, %v1059
    %v1061 = vrot.slane %v1045, %v1060
    %v1063 = vunpack.c.l.s4 1966171168
    %v1064 = vunpack.c.0.s8 %v1063
    %v1065 = vlaneseq
    %v1066 = vshrl.u32 %v1065, 7
    %v1067 = vsub.s32 %v1064, %v1066
    %v1068 = vrot.slane %v1052, %v1067
    %v1070 = vunpack.c.l.s4 1966171168
    %v1071 = vunpack.c.0.s8 %v1070
    %v1072 = vlaneseq
    %v1073 = vshrl.u32 %v1072, 7
    %v1074 = vsub.s32 %v1071, %v1073
    %v1075 = vrot.slane %v1053, %v1074
    %v1077 = vunpack.c.l.s4 1966171168
    %v1078 = vunpack.c.0.s8 %v1077
    %v1079 = vlaneseq
    %v1080 = vshrl.u32 %v1079, 7
    %v1081 = vsub.s32 %v1078, %v1080
    %v1082 = vrot.slane %v1054, %v1081
    %v1083 = vcombine.high %v1061, %v1061
    %v1084 = vcombine.high %v1068, %v1068
    %v1085 = vcombine.high %v1075, %v1075
    %v1086 = vcombine.high %v1082, %v1082
    %v1087 = vlaneseq
    %v1088 = vshrl.u32 %v1087, 7
    %v1089 = vsub.s32 0, %v1088
    %v1090 = vrot.slane %v1012, %v1089
    %v1091 = vlaneseq
    %v1092 = vshrl.u32 %v1091, 7
    %v1093 = vsub.s32 0, %v1092
    %v1094 = vrot.slane %v1026, %v1093
    %v1095 = vlaneseq
    %v1096 = vshrl.u32 %v1095, 7
    %v1097 = vsub.s32 0, %v1096
    %v1098 = vrot.slane %v1034, %v1097
    %v1099 = vlaneseq
    %v1100 = vshrl.u32 %v1099, 7
    %v1101 = vsub.s32 0, %v1100
    %v1102 = vrot.slane %v1036, %v1101
    %v1103 = vlaneseq
    %v1104 = vshrl.u32 %v1103, 7
    %v1105 = vsub.s32 0, %v1104
    %v1106 = vrot.slane %v1019, %v1105
    %v1107 = vlaneseq
    %v1108 = vshrl.u32 %v1107, 7
    %v1109 = vsub.s32 0, %v1108
    %v1110 = vrot.slane %v1033, %v1109
    %v1111 = vlaneseq
    %v1112 = vshrl.u32 %v1111, 7
    %v1113 = vsub.s32 0, %v1112
    %v1114 = vrot.slane %v1035, %v1113
    %v1115 = vlaneseq
    %v1116 = vshrl.u32 %v1115, 7
    %v1117 = vsub.s32 0, %v1116
    %v1118 = vrot.slane %v1037, %v1117
    %v1119 = vlaneseq
    %v1120 = vshrl.u32 %v1119, 7
    %v1121 = vsub.s32 0, %v1120
    %v1122 = vrot.slane %v1061, %v1121
    %v1123 = vlaneseq
    %v1124 = vshrl.u32 %v1123, 7
    %v1125 = vsub.s32 0, %v1124
    %v1126 = vrot.slane %v1075, %v1125
    %v1127 = vlaneseq
    %v1128 = vshrl.u32 %v1127, 7
    %v1129 = vsub.s32 0, %v1128
    %v1130 = vrot.slane %v1083, %v1129
    %v1131 = vlaneseq
    %v1132 = vshrl.u32 %v1131, 7
    %v1133 = vsub.s32 0, %v1132
    %v1134 = vrot.slane %v1085, %v1133
    %v1135 = vlaneseq
    %v1136 = vshrl.u32 %v1135, 7
    %v1137 = vsub.s32 0, %v1136
    %v1138 = vrot.slane %v1068, %v1137
    %v1139 = vlaneseq
    %v1140 = vshrl.u32 %v1139, 7
    %v1141 = vsub.s32 0, %v1140
    %v1142 = vrot.slane %v1082, %v1141
    %v1143 = vlaneseq
    %v1144 = vshrl.u32 %v1143, 7
    %v1145 = vsub.s32 0, %v1144
    %v1146 = vrot.slane %v1084, %v1145
    %v1147 = vlaneseq
    %v1148 = vshrl.u32 %v1147, 7
    %v1149 = vsub.s32 0, %v1148
    %v1150 = vrot.slane %v1086, %v1149
    %v1167 = vmul.f32 %v864, %v1090
    %v1168 = vmul.f32 %v872, %v1094
    %v1169 = vmul.f32 %v880, %v1098
    %v1170 = vmul.f32 %v888, %v1102
    %v1171 = vmul.f32 %v896, %v1106
    %v1172 = vmul.f32 %v904, %v1110
    %v1173 = vmul.f32 %v912, %v1114
    %v1174 = vmul.f32 %v920, %v1118
    %v1175 = vmul.f32 %v928, %v1122
    %v1176 = vmul.f32 %v936, %v1126
    %v1177 = vmul.f32 %v944, %v1130
    %v1178 = vmul.f32 %v952, %v1134
    %v1179 = vmul.f32 %v960, %v1138
    %v1180 = vmul.f32 %v968, %v1142
    %v1181 = vmul.f32 %v976, %v1146
    %v1182 = vmul.f32 %v984, %v1150
    %v1183 = vmul.f32 %v826, 0.0
    %v1184 = vmul.f32 %v842, 0.0
    %v1185 = vadd.f32 %v1183, %v1167
    %v1186 = vadd.f32 %v1184, %v1175
    %v1187 = vmul.f32 %v828, %v1185
    %v1188 = vmul.f32 %v844, %v1186
    %v1189 = vadd.f32 %v1187, %v1168
    %v1190 = vadd.f32 %v1188, %v1176
    %v1191 = vmul.f32 %v830, %v1189
    %v1192 = vmul.f32 %v846, %v1190
    %v1193 = vadd.f32 %v1191, %v1169
    %v1194 = vadd.f32 %v1192, %v1177
    %v1195 = vmul.f32 %v832, %v1193
    %v1196 = vmul.f32 %v848, %v1194
    %v1197 = vadd.f32 %v1195, %v1170
    %v1198 = vadd.f32 %v1196, %v1178
    %v1199 = vmul.f32 %v834, %v1197
    %v1200 = vmul.f32 %v850, %v1198
    %v1201 = vadd.f32 %v1199, %v1171
    %v1202 = vadd.f32 %v1200, %v1179
    %v1203 = vmul.f32 %v836, %v1201
    %v1204 = vmul.f32 %v852, %v1202
    %v1205 = vadd.f32 %v1203, %v1172
    %v1206 = vadd.f32 %v1204, %v1180
    %v1207 = vmul.f32 %v838, %v1205
    %v1208 = vmul.f32 %v854, %v1206
    %v1209 = vadd.f32 %v1207, %v1173
    %v1210 = vadd.f32 %v1208, %v1181
    %v1211 = vmul.f32 %v840, %v1209
    %v1212 = vmul.f32 %v856, %v1210
    %v1213 = vadd.f32 %v1211, %v1174
    %v1214 = vadd.f32 %v1212, %v1182
    %s1216 = sor.u32 256, 12
    %1217 = vbcast.lane.b32.xlu0 %v860, %s1216
    %v1218 = vpop.permute.xlu0 %1217
    %s1220 = sor.u32 256, 12
    %1221 = vbcast.lane.b32.xlu0 %v868, %s1220
    %v1222 = vpop.permute.xlu0 %1221
    %s1224 = sor.u32 256, 12
    %1225 = vbcast.lane.b32.xlu0 %v876, %s1224
    %v1226 = vpop.permute.xlu0 %1225
    %s1228 = sor.u32 256, 12
    %1229 = vbcast.lane.b32.xlu0 %v884, %s1228
    %v1230 = vpop.permute.xlu0 %1229
    %s1232 = sor.u32 256, 12
    %1233 = vbcast.lane.b32.xlu0 %v892, %s1232
    %v1234 = vpop.permute.xlu0 %1233
    %s1236 = sor.u32 256, 12
    %1237 = vbcast.lane.b32.xlu0 %v900, %s1236
    %v1238 = vpop.permute.xlu0 %1237
    %s1240 = sor.u32 256, 12
    %1241 = vbcast.lane.b32.xlu0 %v908, %s1240
    %v1242 = vpop.permute.xlu0 %1241
    %s1244 = sor.u32 256, 12
    %1245 = vbcast.lane.b32.xlu0 %v916, %s1244
    %v1246 = vpop.permute.xlu0 %1245
    %s1248 = sor.u32 256, 12
    %1249 = vbcast.lane.b32.xlu0 %v924, %s1248
    %v1250 = vpop.permute.xlu0 %1249
    %s1252 = sor.u32 256, 12
    %1253 = vbcast.lane.b32.xlu0 %v932, %s1252
    %v1254 = vpop.permute.xlu0 %1253
    %s1256 = sor.u32 256, 12
    %1257 = vbcast.lane.b32.xlu0 %v940, %s1256
    %v1258 = vpop.permute.xlu0 %1257
    %s1260 = sor.u32 256, 12
    %1261 = vbcast.lane.b32.xlu0 %v948, %s1260
    %v1262 = vpop.permute.xlu0 %1261
    %s1264 = sor.u32 256, 12
    %1265 = vbcast.lane.b32.xlu0 %v956, %s1264
    %v1266 = vpop.permute.xlu0 %1265
    %s1268 = sor.u32 256, 12
    %1269 = vbcast.lane.b32.xlu0 %v964, %s1268
    %v1270 = vpop.permute.xlu0 %1269
    %s1272 = sor.u32 256, 12
    %1273 = vbcast.lane.b32.xlu0 %v972, %s1272
    %v1274 = vpop.permute.xlu0 %1273
    %s1276 = sor.u32 256, 12
    %1277 = vbcast.lane.b32.xlu0 %v980, %s1276
    %v1278 = vpop.permute.xlu0 %1277
    %v1279 = vmul.f32 %v1218, %v1185
    %v1280 = vmul.f32 %v1222, %v1189
    %v1281 = vmul.f32 %v1226, %v1193
    %v1282 = vmul.f32 %v1230, %v1197
    %v1283 = vmul.f32 %v1234, %v1201
    %v1284 = vmul.f32 %v1238, %v1205
    %v1285 = vmul.f32 %v1242, %v1209
    %v1286 = vmul.f32 %v1246, %v1213
    %v1287 = vmul.f32 %v1250, %v1186
    %v1288 = vmul.f32 %v1254, %v1190
    %v1289 = vmul.f32 %v1258, %v1194
    %v1290 = vmul.f32 %v1262, %v1198
    %v1291 = vmul.f32 %v1266, %v1202
    %v1292 = vmul.f32 %v1270, %v1206
    %v1293 = vmul.f32 %v1274, %v1210
    %v1294 = vmul.f32 %v1278, %v1214
    %v1295 = vsel %vm100, %v1279, 0.0
    %v1296 = vrot.slane %v1295, 4
    %v1297 = vadd.f32 %v1295, %v1296
    %v1298 = vrot.slane %v1297, 2
    %v1299 = vadd.f32 %v1297, %v1298
    %v1300 = vrot.slane %v1299, 1
    %v1301 = vadd.f32 %v1299, %v1300
    %v1302 = vsel %vm100, %v1280, 0.0
    %v1303 = vrot.slane %v1302, 4
    %v1304 = vadd.f32 %v1302, %v1303
    %v1305 = vrot.slane %v1304, 2
    %v1306 = vadd.f32 %v1304, %v1305
    %v1307 = vrot.slane %v1306, 1
    %v1308 = vadd.f32 %v1306, %v1307
    %v1309 = vsel %vm100, %v1281, 0.0
    %v1310 = vrot.slane %v1309, 4
    %v1311 = vadd.f32 %v1309, %v1310
    %v1312 = vrot.slane %v1311, 2
    %v1313 = vadd.f32 %v1311, %v1312
    %v1314 = vrot.slane %v1313, 1
    %v1315 = vadd.f32 %v1313, %v1314
    %v1316 = vsel %vm100, %v1282, 0.0
    %v1317 = vrot.slane %v1316, 4
    %v1318 = vadd.f32 %v1316, %v1317
    %v1319 = vrot.slane %v1318, 2
    %v1320 = vadd.f32 %v1318, %v1319
    %v1321 = vrot.slane %v1320, 1
    %v1322 = vadd.f32 %v1320, %v1321
    %v1323 = vsel %vm100, %v1283, 0.0
    %v1324 = vrot.slane %v1323, 4
    %v1325 = vadd.f32 %v1323, %v1324
    %v1326 = vrot.slane %v1325, 2
    %v1327 = vadd.f32 %v1325, %v1326
    %v1328 = vrot.slane %v1327, 1
    %v1329 = vadd.f32 %v1327, %v1328
    %v1330 = vsel %vm100, %v1284, 0.0
    %v1331 = vrot.slane %v1330, 4
    %v1332 = vadd.f32 %v1330, %v1331
    %v1333 = vrot.slane %v1332, 2
    %v1334 = vadd.f32 %v1332, %v1333
    %v1335 = vrot.slane %v1334, 1
    %v1336 = vadd.f32 %v1334, %v1335
    %v1337 = vsel %vm100, %v1285, 0.0
    %v1338 = vrot.slane %v1337, 4
    %v1339 = vadd.f32 %v1337, %v1338
    %v1340 = vrot.slane %v1339, 2
    %v1341 = vadd.f32 %v1339, %v1340
    %v1342 = vrot.slane %v1341, 1
    %v1343 = vadd.f32 %v1341, %v1342
    %v1344 = vsel %vm100, %v1286, 0.0
    %v1345 = vrot.slane %v1344, 4
    %v1346 = vadd.f32 %v1344, %v1345
    %v1347 = vrot.slane %v1346, 2
    %v1348 = vadd.f32 %v1346, %v1347
    %v1349 = vrot.slane %v1348, 1
    %v1350 = vadd.f32 %v1348, %v1349
    %v1351 = vsel %vm100, %v1287, 0.0
    %v1352 = vrot.slane %v1351, 4
    %v1353 = vadd.f32 %v1351, %v1352
    %v1354 = vrot.slane %v1353, 2
    %v1355 = vadd.f32 %v1353, %v1354
    %v1356 = vrot.slane %v1355, 1
    %v1357 = vadd.f32 %v1355, %v1356
    %v1358 = vsel %vm100, %v1288, 0.0
    %v1359 = vrot.slane %v1358, 4
    %v1360 = vadd.f32 %v1358, %v1359
    %v1361 = vrot.slane %v1360, 2
    %v1362 = vadd.f32 %v1360, %v1361
    %v1363 = vrot.slane %v1362, 1
    %v1364 = vadd.f32 %v1362, %v1363
    %v1365 = vsel %vm100, %v1289, 0.0
    %v1366 = vrot.slane %v1365, 4
    %v1367 = vadd.f32 %v1365, %v1366
    %v1368 = vrot.slane %v1367, 2
    %v1369 = vadd.f32 %v1367, %v1368
    %v1370 = vrot.slane %v1369, 1
    %v1371 = vadd.f32 %v1369, %v1370
    %v1372 = vsel %vm100, %v1290, 0.0
    %v1373 = vrot.slane %v1372, 4
    %v1374 = vadd.f32 %v1372, %v1373
    %v1375 = vrot.slane %v1374, 2
    %v1376 = vadd.f32 %v1374, %v1375
    %v1377 = vrot.slane %v1376, 1
    %v1378 = vadd.f32 %v1376, %v1377
    %v1379 = vsel %vm100, %v1291, 0.0
    %v1380 = vrot.slane %v1379, 4
    %v1381 = vadd.f32 %v1379, %v1380
    %v1382 = vrot.slane %v1381, 2
    %v1383 = vadd.f32 %v1381, %v1382
    %v1384 = vrot.slane %v1383, 1
    %v1385 = vadd.f32 %v1383, %v1384
    %v1386 = vsel %vm100, %v1292, 0.0
    %v1387 = vrot.slane %v1386, 4
    %v1388 = vadd.f32 %v1386, %v1387
    %v1389 = vrot.slane %v1388, 2
    %v1390 = vadd.f32 %v1388, %v1389
    %v1391 = vrot.slane %v1390, 1
    %v1392 = vadd.f32 %v1390, %v1391
    %v1393 = vsel %vm100, %v1293, 0.0
    %v1394 = vrot.slane %v1393, 4
    %v1395 = vadd.f32 %v1393, %v1394
    %v1396 = vrot.slane %v1395, 2
    %v1397 = vadd.f32 %v1395, %v1396
    %v1398 = vrot.slane %v1397, 1
    %v1399 = vadd.f32 %v1397, %v1398
    %v1400 = vsel %vm100, %v1294, 0.0
    %v1401 = vrot.slane %v1400, 4
    %v1402 = vadd.f32 %v1400, %v1401
    %v1403 = vrot.slane %v1402, 2
    %v1404 = vadd.f32 %v1402, %v1403
    %v1405 = vrot.slane %v1404, 1
    %v1406 = vadd.f32 %v1404, %v1405
    %v1407 = vlaneseq
    %v1408 = vshrl.u32 %v1407, 7
    %v1409 = vsub.s32 5, %v1408
    %v1410 = vrot.slane %v88, %v1409
    %v1411 = vmul.f32 %v1410, %v423
    %v1412 = vmul.f32 %v1410, %v424
    %v1415 = vrot.slane %v1411, 1
    %v1416 = vrot.slane %v1411, 2
    %v1417 = vrot.slane %v1411, 3
    %v1418 = vrot.slane %v1411, 4
    %v1419 = vrot.slane %v1411, 5
    %v1420 = vrot.slane %v1411, 6
    %v1421 = vrot.slane %v1411, 7
    %v1422 = vrot.slane %v1412, 1
    %v1423 = vrot.slane %v1412, 2
    %v1424 = vrot.slane %v1412, 3
    %v1425 = vrot.slane %v1412, 4
    %v1426 = vrot.slane %v1412, 5
    %v1427 = vrot.slane %v1412, 6
    %v1428 = vrot.slane %v1412, 7
    %v1445 = vadd.f32 %v1301, %v1411
    %v1446 = vadd.f32 %v1308, %v1415
    %v1447 = vadd.f32 %v1315, %v1416
    %v1448 = vadd.f32 %v1322, %v1417
    %v1449 = vadd.f32 %v1329, %v1418
    %v1450 = vadd.f32 %v1336, %v1419
    %v1451 = vadd.f32 %v1343, %v1420
    %v1452 = vadd.f32 %v1350, %v1421
    %v1453 = vadd.f32 %v1357, %v1412
    %v1454 = vadd.f32 %v1364, %v1422
    %v1455 = vadd.f32 %v1371, %v1423
    %v1456 = vadd.f32 %v1378, %v1424
    %v1457 = vadd.f32 %v1385, %v1425
    %v1458 = vadd.f32 %v1392, %v1426
    %v1459 = vadd.f32 %v1399, %v1427
    %v1460 = vadd.f32 %v1406, %v1428
    %v1461 = vxor.u32 %v344, 2147483648
    %v1462 = vxor.u32 %v349, 2147483648
    %v1463 = vmul.f32 %v1461, 1.442695
    %v1464 = vpow.pop %v1463
    %v1465 = vmul.f32 %v1462, 1.442695
    %v1466 = vpow.pop %v1465
    %v1467 = vadd.f32 %v1464, 1.0
    %v1468 = vadd.f32 %v1466, 1.0
    %v1469 = vrcp.pop %v1467
    %v1470 = vmul.f32 1.0, %v1469
    %v1471 = vrcp.pop %v1468
    %v1472 = vmul.f32 1.0, %v1471
    %v1473 = vmul.f32 %v344, %v1470
    %v1474 = vmul.f32 %v349, %v1472
    %v1477 = vrot.slane %v1473, 1
    %v1478 = vrot.slane %v1473, 2
    %v1479 = vrot.slane %v1473, 3
    %v1480 = vrot.slane %v1473, 4
    %v1481 = vrot.slane %v1473, 5
    %v1482 = vrot.slane %v1473, 6
    %v1483 = vrot.slane %v1473, 7
    %v1484 = vrot.slane %v1474, 1
    %v1485 = vrot.slane %v1474, 2
    %v1486 = vrot.slane %v1474, 3
    %v1487 = vrot.slane %v1474, 4
    %v1488 = vrot.slane %v1474, 5
    %v1489 = vrot.slane %v1474, 6
    %v1490 = vrot.slane %v1474, 7
    %1491 = vrot.lane.b32.xlu0 %v1473, 64
    %v1492 = vpop.permute.xlu0 %1491
    %1493 = vrot.lane.b32.xlu0 %v1477, 64
    %v1494 = vpop.permute.xlu0 %1493
    %1495 = vrot.lane.b32.xlu0 %v1478, 64
    %v1496 = vpop.permute.xlu0 %1495
    %1497 = vrot.lane.b32.xlu0 %v1479, 64
    %v1498 = vpop.permute.xlu0 %1497
    %1499 = vrot.lane.b32.xlu0 %v1480, 64
    %v1500 = vpop.permute.xlu0 %1499
    %1501 = vrot.lane.b32.xlu0 %v1481, 64
    %v1502 = vpop.permute.xlu0 %1501
    %1503 = vrot.lane.b32.xlu0 %v1482, 64
    %v1504 = vpop.permute.xlu0 %1503
    %1505 = vrot.lane.b32.xlu0 %v1483, 64
    %v1506 = vpop.permute.xlu0 %1505
    %1507 = vrot.lane.b32.xlu0 %v1474, 64
    %v1508 = vpop.permute.xlu0 %1507
    %1509 = vrot.lane.b32.xlu0 %v1484, 64
    %v1510 = vpop.permute.xlu0 %1509
    %1511 = vrot.lane.b32.xlu0 %v1485, 64
    %v1512 = vpop.permute.xlu0 %1511
    %1513 = vrot.lane.b32.xlu0 %v1486, 64
    %v1514 = vpop.permute.xlu0 %1513
    %1515 = vrot.lane.b32.xlu0 %v1487, 64
    %v1516 = vpop.permute.xlu0 %1515
    %1517 = vrot.lane.b32.xlu0 %v1488, 64
    %v1518 = vpop.permute.xlu0 %1517
    %1519 = vrot.lane.b32.xlu0 %v1489, 64
    %v1520 = vpop.permute.xlu0 %1519
    %1521 = vrot.lane.b32.xlu0 %v1490, 64
    %v1522 = vpop.permute.xlu0 %1521
    %v1539 = vmul.f32 %v1445, %v1492
    %v1540 = vmul.f32 %v1446, %v1494
    %v1541 = vmul.f32 %v1447, %v1496
    %v1542 = vmul.f32 %v1448, %v1498
    %v1543 = vmul.f32 %v1449, %v1500
    %v1544 = vmul.f32 %v1450, %v1502
    %v1545 = vmul.f32 %v1451, %v1504
    %v1546 = vmul.f32 %v1452, %v1506
    %v1547 = vmul.f32 %v1453, %v1508
    %v1548 = vmul.f32 %v1454, %v1510
    %v1549 = vmul.f32 %v1455, %v1512
    %v1550 = vmul.f32 %v1456, %v1514
    %v1551 = vmul.f32 %v1457, %v1516
    %v1552 = vmul.f32 %v1458, %v1518
    %v1553 = vmul.f32 %v1459, %v1520
    %v1554 = vmul.f32 %v1460, %v1522
    %v1571 = vrot.slane %v1540, 7
    %vm1572 = vcmask 1041409
    %v1573 = vsel %vm1572, %v1571, %v1539
    %v1574 = vrot.slane %v1541, 6
    %vm1575 = vcmask 1042434
    %v1576 = vsel %vm1575, %v1574, %v1573
    %v1577 = vrot.slane %v1542, 5
    %vm1578 = vcmask 1043459
    %v1579 = vsel %vm1578, %v1577, %v1576
    %v1580 = vrot.slane %v1543, 4
    %vm1581 = vcmask 1044484
    %v1582 = vsel %vm1581, %v1580, %v1579
    %v1583 = vrot.slane %v1544, 3
    %vm1584 = vcmask 1045509
    %v1585 = vsel %vm1584, %v1583, %v1582
    %v1586 = vrot.slane %v1545, 2
    %vm1587 = vcmask 1046534
    %v1588 = vsel %vm1587, %v1586, %v1585
    %v1589 = vrot.slane %v1546, 1
    %vm1590 = vcmask 1047559
    %v1591 = vsel %vm1590, %v1589, %v1588
    %v1592 = vrot.slane %v1548, 7
    %v1593 = vsel %vm1572, %v1592, %v1547
    %v1594 = vrot.slane %v1549, 6
    %v1595 = vsel %vm1575, %v1594, %v1593
    %v1596 = vrot.slane %v1550, 5
    %v1597 = vsel %vm1578, %v1596, %v1595
    %v1598 = vrot.slane %v1551, 4
    %v1599 = vsel %vm1581, %v1598, %v1597
    %v1600 = vrot.slane %v1552, 3
    %v1601 = vsel %vm1584, %v1600, %v1599
    %v1602 = vrot.slane %v1553, 2
    %v1603 = vsel %vm1587, %v1602, %v1601
    %v1604 = vrot.slane %v1554, 1
    %v1605 = vsel %vm1590, %v1604, %v1603
    %v1606 = vsel %vm100, %v1591, 0
    %v1608 = vsel %vm100, %v1605, 0
    %1610 = vmatprep.subr.mxu0 0.0
    %1611 = vmatpush1.msra.mxu0 0.0
    %1612 = vmatprep.subr.mxu0 0.0
    %1613 = vmatpush1.msra.mxu0 0.0
    %1614 = vmatprep.subr.mxu0 0.0
    %1615 = vmatpush1.msra.mxu0 0.0
    %1616 = vmatprep.subr.mxu0 0.0
    %1617 = vmatpush1.msra.mxu0 0.0
    %1618 = vmatprep.subr.mxu0 0.0
    %1619 = vmatpush1.msra.mxu0 0.0
    %1620 = vmatprep.subr.mxu0 0.0
    %1621 = vmatpush1.msra.mxu0 0.0
    %1622 = vmatprep.subr.mxu0 0.0
    %1623 = vmatpush1.msra.mxu0 0.0
    %1624 = vmatprep.subr.mxu0 0.0
    %1625 = vmatpush1.msra.mxu0 0.0
    %1626 = vmatprep.subr.mxu0 0.0
    %1627 = vmatpush1.msra.mxu0 %v84
    %1628 = vmatprep.subr.mxu0 0.0
    %1629 = vmatpush1.msra.mxu0 %v83
    %1630 = vmatprep.subr.mxu0 0.0
    %1631 = vmatpush1.msra.mxu0 %v82
    %1632 = vmatprep.subr.mxu0 0.0
    %1633 = vmatpush1.msra.mxu0 %v81
    %1634 = vmatprep.subr.mxu0 0.0
    %1635 = vmatpush1.msra.mxu0 %v80
    %1636 = vmatprep.subr.mxu0 0.0
    %1637 = vmatpush1.msra.mxu0 %v79
    %1638 = vmatprep.subr.mxu0 0.0
    %1639 = vmatpush1.msra.mxu0 %v78
    %1640 = vmatprep.subr.mxu0 0.0
    %1641 = vmatpush1.msra.mxu0 %v77
    %1642 = vmatprep.subr.mxu0 0.0
    %1643 = vmatpush2.msra.mxu0 0.0
    %1644 = vmatprep.subr.mxu0 0.0
    %1645 = vmatpush2.msra.mxu0 0.0
    %1646 = vmatprep.subr.mxu0 0.0
    %1647 = vmatpush2.msra.mxu0 0.0
    %1648 = vmatprep.subr.mxu0 0.0
    %1649 = vmatpush2.msra.mxu0 0.0
    %1650 = vmatprep.subr.mxu0 0.0
    %1651 = vmatpush2.msra.mxu0 0.0
    %1652 = vmatprep.subr.mxu0 0.0
    %1653 = vmatpush2.msra.mxu0 0.0
    %1654 = vmatprep.subr.mxu0 0.0
    %1655 = vmatpush2.msra.mxu0 0.0
    %1656 = vmatprep.subr.mxu0 0.0
    %1657 = vmatpush2.msra.mxu0 0.0
    %1658 = vmatprep.subr.mxu0 0.0
    %1659 = vmatpush2.msra.mxu0 0.0
    %1660 = vmatprep.subr.mxu0 0.0
    %1661 = vmatpush2.msra.mxu0 0.0
    %1662 = vmatprep.subr.mxu0 0.0
    %1663 = vmatpush2.msra.mxu0 0.0
    %1664 = vmatprep.subr.mxu0 0.0
    %1665 = vmatpush2.msra.mxu0 0.0
    %1666 = vmatprep.subr.mxu0 0.0
    %1667 = vmatpush2.msra.mxu0 0.0
    %1668 = vmatprep.subr.mxu0 0.0
    %1669 = vmatpush2.msra.mxu0 0.0
    %1670 = vmatprep.subr.mxu0 0.0
    %1671 = vmatpush2.msra.mxu0 0.0
    %1672 = vmatprep.subr.mxu0 0.0
    %1673 = vmatpush2.msra.mxu0 0.0
    %1674 = vmatprep.mubr.f32.mxu0 0.0
    %1675 = vmatmul.mubr.f32.gmra.mxu0 %v1606
    %v1676 = vpop.f32.mrf.mxu0
    %v1677 = vadd.f32 0.0, %v1676
    %v1678 = vpop.f32.mrf.mxu0
    %1679 = vmatprep.mubr.f32.mxu0 0.0
    %1680 = vmatmul.mubr.f32.gmra.mxu0 %v1608
    %v1681 = vpop.f32.mrf.mxu0
    %v1682 = vadd.f32 0.0, %v1681
    %v1683 = vpop.f32.mrf.mxu0
    %1684 = vdwg.mxu0
    %1687 = vrot.lane.b32.xlu0 %v1677, 64
    %v1688 = vpop.permute.xlu0 %1687
    %1689 = vrot.lane.b32.xlu0 %v1682, 64
    %v1690 = vpop.permute.xlu0 %1689
    %v1693 = vmul.f32 %v262, %v1688
    %v1694 = vmul.f32 %v266, %v1690
    %1697 = vrot.lane.b32.xlu0 %v1693, 64
    %v1698 = vpop.permute.xlu0 %1697
    %1699 = vrot.lane.b32.xlu0 %v1694, 64
    %v1700 = vpop.permute.xlu0 %1699
    %v1703 = vadd.f32 %v54, %v1698
    %v1704 = vadd.f32 %v55, %v1700
    %1705 = vst.msk [vmem:[#allocation8] sm:$0xff] %vm174, %v1703
    %1706 = vst.msk [vmem:[#allocation8 + $0x8] sm:$0xff] %vm174, %v1704
    // Predicated region
    $region26: #{vmamba_mamba_block.1} parent=1 // pred_check
      _
    $region27: #{vmamba_mamba_block.1} parent=1 // pred_check_branch
      %1708 = sbr.rel (0) target = $region29
    $region28: #{vmamba_mamba_block.1} parent=1 // pred_region
      %s1710 = ssub.s32 256, 256
      %1711 = vsyncadd [#allocation4], %s1710
      %s1712 = sshll.u32 [#allocation8], 4
      %s1713 = int_to_ptr.vmem [resolvable:$true] %s1712
      %1718 = dma.vmem_to_hbm [thread:$0]  %s1713, 256, %s3, [#allocation4], 128, 128, 8
    $region29: #{vmamba_mamba_block.1} parent=1 // pred_fallthru
      _
    // Predicated region
    $region30: #{vmamba_mamba_block.1} parent=1 // pred_check
      _
    $region31: #{vmamba_mamba_block.1} parent=1 // pred_check_branch
      %1720 = sbr.rel (0) target = $region33
    $region32: #{vmamba_mamba_block.1} parent=1 // pred_region
      %1721 = dma.done [#allocation4], 256
    $region33: #{vmamba_mamba_block.1} parent=1 // pred_fallthru
      _
    %1722 = vsyncpa [#allocation3], 1
    %1723 = vsyncpa [#allocation6], 1
    %1724 = vsyncpa [#allocation4], 1

</llo_original>
